<compile_context>
chip_gen: v7x
topology: tpu7x:2x2x1
jax: 0.10.0
libtpu: 0.0.40
codegen_flags: <defaults>
</compile_context>

<pallas_src>
import functools
import math

import jax
import jax.numpy as jnp
from jax.experimental import pallas as pl
from jax.experimental.pallas import tpu as pltpu

# ---- configuration -----------------------------------------------------------
B, S = 2, 8                            # batch, sequence
H, FF, NCLS, VOCAB = 32, 64, 3, 100    # logical sizes of the synthetic mini-RoBERTa
HP, FFP, NP = 128, 128, 128            # lane-padded sizes (128-lane-dense compute/stores)
LN_EPS = 1e-5                          # nn.LayerNorm default
INV_SQRT_H = 1.0 / math.sqrt(H)
INV_H = 1.0 / H


# ---- in-kernel helpers -------------------------------------------------------
def _gelu(x):
    # exact (erf) GELU — matches torch.nn.functional.gelu default
    return 0.5 * x * (1.0 + jax.lax.erf(x * (1.0 / math.sqrt(2.0))))


def _ln_padded(x, g, b):
    # LayerNorm over the *real* H features of a zero-padded (..., HP) tensor.
    # Padded lanes are zero, so the full-lane sum / sum-of-squares equal the
    # real-lane sums; variance via E[x^2] - mu^2 with divisor H.  gamma/beta are
    # zero on padded lanes, so padded lanes stay exactly 0 afterwards.
    s = jnp.sum(x, axis=-1, keepdims=True)
    ss = jnp.sum(x * x, axis=-1, keepdims=True)
    mu = s * INV_H
    var = ss * INV_H - mu * mu
    return (x - mu) * jax.lax.rsqrt(var + LN_EPS) * g + b


# ---- fused kernel: embeddings-LN -> encoder layer -> pooler -> head ----------
def roberta_fused_kernel(
        x_ref, mask_ref,
        embg_ref, embb_ref,
        wq_ref, bq_ref, wk_ref, bk_ref, wv_ref, bv_ref, wo_ref, bo_ref,
        ln1g_ref, ln1b_ref, w1_ref, b1_ref, w2_ref, b2_ref, ln2g_ref, ln2b_ref,
        wp_ref, bp_ref, hlng_ref, hlnb_ref,
        wi1_ref, bi1_ref, wi2_ref, bi2_ref, wc_ref, bc_ref,
        out_ref):
    # embeddings LayerNorm (folded into the kernel; no HBM round trip of x)
    x = _ln_padded(x_ref[0], embg_ref[...], embb_ref[...])              # (S, HP)

    # ---- single-head self-attention ------------------------------------------
    # attention scale folded into q (one vmul on the small q tile, cheaper than
    # scaling the (S,S) score matrix after the MXU)
    q = (jnp.dot(x, wq_ref[...], preferred_element_type=jnp.float32)
         + bq_ref[...]) * INV_SQRT_H
    k = jnp.dot(x, wk_ref[...], preferred_element_type=jnp.float32) + bk_ref[...]
    v = jnp.dot(x, wv_ref[...], preferred_element_type=jnp.float32) + bv_ref[...]

    # q @ k^T with the transpose absorbed into the MXU operand feed (no vxpose)
    scores = jax.lax.dot_general(q, k, (((1,), (1,)), ((), ())),
                                 preferred_element_type=jnp.float32)
    scores = scores + (1.0 - mask_ref[0]) * (-1e9)                      # mask padded keys

    m = jnp.max(scores, axis=-1, keepdims=True)
    e = jnp.exp(scores - m)
    attn = e * pl.reciprocal(jnp.sum(e, axis=-1, keepdims=True), approx=True)
    ctx = jnp.dot(attn, v, preferred_element_type=jnp.float32)          # (S, HP)

    attn_out = jnp.dot(ctx, wo_ref[...], preferred_element_type=jnp.float32) + bo_ref[...]
    h1 = _ln_padded(x + attn_out, ln1g_ref[...], ln1b_ref[...])

    # ---- feed-forward ---------------------------------------------------------
    ff = _gelu(jnp.dot(h1, w1_ref[...], preferred_element_type=jnp.float32) + b1_ref[...])
    ff = jnp.dot(ff, w2_ref[...], preferred_element_type=jnp.float32) + b2_ref[...]
    h2 = _ln_padded(h1 + ff, ln2g_ref[...], ln2b_ref[...])              # (S, HP)

    # ---- RoBERTa pooler + ModelWrapper head (CLS row only; h2 never hits HBM)
    cls = h2[0:1, :]                                                    # (1, HP)
    pooled = jnp.tanh(jnp.dot(cls, wp_ref[...], preferred_element_type=jnp.float32)
                      + bp_ref[...])
    y = _ln_padded(pooled, hlng_ref[...], hlnb_ref[...])                # dropout1 = id (eval)

    r = y
    y = _gelu(jnp.dot(y, wi1_ref[...], preferred_element_type=jnp.float32)
              + bi1_ref[...]) + r                                       # dropout2 = id
    r = y
    y = _gelu(jnp.dot(y, wi2_ref[...], preferred_element_type=jnp.float32)
              + bi2_ref[...]) + r                                       # dropout2 = id

    out_ref[0] = jnp.dot(y, wc_ref[...], preferred_element_type=jnp.float32) + bc_ref[...]


def roberta_fused(x, mask, weights):
    in_specs = (
        [pl.BlockSpec((1, S, HP), lambda b: (b, 0, 0)),   # embeddings, one batch row
         pl.BlockSpec((1, 1, S), lambda b: (b, 0, 0))]    # attention mask, one row
        # grid-invariant weights: constant block index => fetched once, resident
        + [pl.BlockSpec(w.shape, lambda b: (0, 0)) for w in weights]
    )
    return pl.pallas_call(
        roberta_fused_kernel,
        out_shape=jax.ShapeDtypeStruct((B, 1, NP), jnp.float32),        # lane-dense logits
        grid=(B,),
        in_specs=in_specs,
        out_specs=pl.BlockSpec((1, 1, NP), lambda b: (b, 0, 0)),
        compiler_params=pltpu.CompilerParams(dimension_semantics=("parallel",)),
    )(x, mask, *weights)


# ---- parameter initialization (deterministic, synthetic) ---------------------
def init_params(key):
    def dense(k, din, dout):
        kw, kb = jax.random.split(k)
        return (0.02 * jax.random.normal(kw, (din, dout), jnp.float32),
                0.02 * jax.random.normal(kb, (1, dout), jnp.float32))

    ks = jax.random.split(key, 12)
    p = {}
    p["word_emb"] = 0.02 * jax.random.normal(ks[0], (VOCAB, H), jnp.float32)
    p["pos_emb"] = 0.02 * jax.random.normal(ks[1], (S, H), jnp.float32)
    p["wq"], p["bq"] = dense(ks[2], H, H)
    p["wk"], p["bk"] = dense(ks[3], H, H)
    p["wv"], p["bv"] = dense(ks[4], H, H)
    p["wo"], p["bo"] = dense(ks[5], H, H)
    p["w1"], p["b1"] = dense(ks[6], H, FF)
    p["w2"], p["b2"] = dense(ks[7], FF, H)
    p["wp"], p["bp"] = dense(ks[8], H, H)      # pooler dense
    p["wi1"], p["bi1"] = dense(ks[9], H, H)    # intermediate1
    p["wi2"], p["bi2"] = dense(ks[10], H, H)   # intermediate2
    p["wc"], p["bc"] = dense(ks[11], H, NCLS)  # classifier
    return p


def _pad_to(a, shape):
    return jnp.pad(a, [(0, t - s) for s, t in zip(a.shape, shape)])


def pad_params(p):
    # zero-pad all weights ONCE at init so every in-kernel matmul / store is
    # 128-lane dense (no masked vst.msk partial stores, no repacking per call)
    gamma = _pad_to(jnp.ones((1, H), jnp.float32), (1, HP))  # 1 on real lanes, 0 on pad
    beta = jnp.zeros((1, HP), jnp.float32)
    weights = [
        # encoder
        gamma, beta,                                          # embeddings LayerNorm
        _pad_to(p["wq"], (HP, HP)), _pad_to(p["bq"], (1, HP)),
        _pad_to(p["wk"], (HP, HP)), _pad_to(p["bk"], (1, HP)),
        _pad_to(p["wv"], (HP, HP)), _pad_to(p["bv"], (1, HP)),
        _pad_to(p["wo"], (HP, HP)), _pad_to(p["bo"], (1, HP)),
        gamma, beta,                                          # post-attention LayerNorm
        _pad_to(p["w1"], (HP, FFP)), _pad_to(p["b1"], (1, FFP)),
        _pad_to(p["w2"], (FFP, HP)), _pad_to(p["b2"], (1, HP)),
        gamma, beta,                                          # post-FFN LayerNorm
        # pooler + classification head
        _pad_to(p["wp"], (HP, HP)), _pad_to(p["bp"], (1, HP)),
        gamma, beta,                                          # head LayerNorm
        _pad_to(p["wi1"], (HP, HP)), _pad_to(p["bi1"], (1, HP)),
        _pad_to(p["wi2"], (HP, HP)), _pad_to(p["bi2"], (1, HP)),
        _pad_to(p["wc"], (HP, NP)), _pad_to(p["bc"], (1, NP)),
    ]
    return {"word_emb": _pad_to(p["word_emb"], (VOCAB, HP)),
            "pos_emb": _pad_to(p["pos_emb"], (S, HP)),
            "weights": weights}


# ---- full forward pass -------------------------------------------------------
def roberta_wrapper_forward(input_ids, attention_mask, padded):
    # TODO(synk): embedding-table gather stays in plain JAX/XLA (data-dependent
    # gather); everything downstream runs in the single fused Pallas kernel.
    x = padded["word_emb"][input_ids] + padded["pos_emb"][None, :, :]   # (B, S, HP)
    mask = attention_mask.astype(jnp.float32).reshape(B, 1, S)
    logits_padded = roberta_fused(x, mask, padded["weights"])           # (B, 1, NP)
    return logits_padded[:, 0, :NCLS]


# ---- pure-JAX reference (unpadded) for a correctness check -------------------
def _ln_ref(x):
    mu = jnp.mean(x, axis=-1, keepdims=True)
    var = jnp.mean(jnp.square(x - mu), axis=-1, keepdims=True)
    return (x - mu) * jax.lax.rsqrt(var + LN_EPS)


def reference_forward(input_ids, attention_mask, p):
    x = p["word_emb"][input_ids] + p["pos_emb"][None, :, :]
    x = _ln_ref(x)
    bias = (1.0 - attention_mask.astype(jnp.float32))[:, None, :] * -1e9
    q = x @ p["wq"] + p["bq"]
    k = x @ p["wk"] + p["bk"]
    v = x @ p["wv"] + p["bv"]
    s = jnp.einsum("bqd,bkd->bqk", q, k) * INV_SQRT_H + bias
    a = jax.nn.softmax(s, axis=-1)
    ctx = jnp.einsum("bqk,bkd->bqd", a, v)
    h1 = _ln_ref(x + ctx @ p["wo"] + p["bo"])
    ff = _gelu(h1 @ p["w1"] + p["b1"]) @ p["w2"] + p["b2"]
    h2 = _ln_ref(h1 + ff)
    pooled = jnp.tanh(h2[:, 0, :] @ p["wp"] + p["bp"])
    y = _ln_ref(pooled)
    y = _gelu(y @ p["wi1"] + p["bi1"]) + y
    r = y
    y = _gelu(y @ p["wi2"] + p["bi2"]) + r
    return y @ p["wc"] + p["bc"]


if __name__ == "__main__":
    key = jax.random.PRNGKey(0)
    k_ids, k_params = jax.random.split(key)

    input_ids = jax.random.randint(k_ids, (B, S), 0, VOCAB, dtype=jnp.int32)
    attention_mask = jnp.ones((B, S), dtype=jnp.int32).at[:, -2:].set(0)  # pad last 2 tokens

    params = init_params(k_params)
    padded = pad_params(params)

    fwd = jax.jit(functools.partial(roberta_wrapper_forward, padded=padded))
    logits = fwd(input_ids, attention_mask)
    jax.block_until_ready(logits)

    ref = reference_forward(input_ids, attention_mask, params)

    assert logits.shape == (B, NCLS), logits.shape
    assert bool(jnp.all(jnp.isfinite(logits)))
    assert bool(jnp.allclose(logits, ref, rtol=5e-2, atol=5e-2)), (logits, ref)
    print("KERNEL_OK")
</pallas_src>

<mosaic_0001>
module attributes {stable_mosaic.version = 11 : i64} {
  func.func @roberta_fused_kernel(%arg0: i32, %arg1: memref<1x8x128xf32, #tpu.memory_space<vmem>>, %arg2: memref<1x1x8xf32, #tpu.memory_space<vmem>>, %arg3: memref<1x128xf32, #tpu.memory_space<vmem>>, %arg4: memref<1x128xf32, #tpu.memory_space<vmem>>, %arg5: memref<128x128xf32, #tpu.memory_space<vmem>>, %arg6: memref<1x128xf32, #tpu.memory_space<vmem>>, %arg7: memref<128x128xf32, #tpu.memory_space<vmem>>, %arg8: memref<1x128xf32, #tpu.memory_space<vmem>>, %arg9: memref<128x128xf32, #tpu.memory_space<vmem>>, %arg10: memref<1x128xf32, #tpu.memory_space<vmem>>, %arg11: memref<128x128xf32, #tpu.memory_space<vmem>>, %arg12: memref<1x128xf32, #tpu.memory_space<vmem>>, %arg13: memref<1x128xf32, #tpu.memory_space<vmem>>, %arg14: memref<1x128xf32, #tpu.memory_space<vmem>>, %arg15: memref<128x128xf32, #tpu.memory_space<vmem>>, %arg16: memref<1x128xf32, #tpu.memory_space<vmem>>, %arg17: memref<128x128xf32, #tpu.memory_space<vmem>>, %arg18: memref<1x128xf32, #tpu.memory_space<vmem>>, %arg19: memref<1x128xf32, #tpu.memory_space<vmem>>, %arg20: memref<1x128xf32, #tpu.memory_space<vmem>>, %arg21: memref<128x128xf32, #tpu.memory_space<vmem>>, %arg22: memref<1x128xf32, #tpu.memory_space<vmem>>, %arg23: memref<1x128xf32, #tpu.memory_space<vmem>>, %arg24: memref<1x128xf32, #tpu.memory_space<vmem>>, %arg25: memref<128x128xf32, #tpu.memory_space<vmem>>, %arg26: memref<1x128xf32, #tpu.memory_space<vmem>>, %arg27: memref<128x128xf32, #tpu.memory_space<vmem>>, %arg28: memref<1x128xf32, #tpu.memory_space<vmem>>, %arg29: memref<128x128xf32, #tpu.memory_space<vmem>>, %arg30: memref<1x128xf32, #tpu.memory_space<vmem>>, %arg31: memref<1x1x128xf32, #tpu.memory_space<vmem>>) attributes {dimension_semantics = [#tpu.dimension_semantics<parallel>], iteration_bounds = array<i64: 2>, scalar_prefetch = 0 : i64, scratch_operands = 0 : i64, tpu.core_type = #tpu.core_type<tc>, window_params = [{transform_indices = @transform_0, window_bounds = array<i64: 1, 8, 128>}, {transform_indices = @transform_1, window_bounds = array<i64: 1, 1, 8>}, {pipeline_mode = #tpu.pipeline_mode<synchronous>, transform_indices = @transform_2, window_bounds = array<i64: 1, 128>}, {pipeline_mode = #tpu.pipeline_mode<synchronous>, transform_indices = @transform_3, window_bounds = array<i64: 1, 128>}, {pipeline_mode = #tpu.pipeline_mode<synchronous>, transform_indices = @transform_4, window_bounds = array<i64: 128, 128>}, {pipeline_mode = #tpu.pipeline_mode<synchronous>, transform_indices = @transform_5, window_bounds = array<i64: 1, 128>}, {pipeline_mode = #tpu.pipeline_mode<synchronous>, transform_indices = @transform_6, window_bounds = array<i64: 128, 128>}, {pipeline_mode = #tpu.pipeline_mode<synchronous>, transform_indices = @transform_7, window_bounds = array<i64: 1, 128>}, {pipeline_mode = #tpu.pipeline_mode<synchronous>, transform_indices = @transform_8, window_bounds = array<i64: 128, 128>}, {pipeline_mode = #tpu.pipeline_mode<synchronous>, transform_indices = @transform_9, window_bounds = array<i64: 1, 128>}, {pipeline_mode = #tpu.pipeline_mode<synchronous>, transform_indices = @transform_10, window_bounds = array<i64: 128, 128>}, {pipeline_mode = #tpu.pipeline_mode<synchronous>, transform_indices = @transform_11, window_bounds = array<i64: 1, 128>}, {pipeline_mode = #tpu.pipeline_mode<synchronous>, transform_indices = @transform_12, window_bounds = array<i64: 1, 128>}, {pipeline_mode = #tpu.pipeline_mode<synchronous>, transform_indices = @transform_13, window_bounds = array<i64: 1, 128>}, {pipeline_mode = #tpu.pipeline_mode<synchronous>, transform_indices = @transform_14, window_bounds = array<i64: 128, 128>}, {pipeline_mode = #tpu.pipeline_mode<synchronous>, transform_indices = @transform_15, window_bounds = array<i64: 1, 128>}, {pipeline_mode = #tpu.pipeline_mode<synchronous>, transform_indices = @transform_16, window_bounds = array<i64: 128, 128>}, {pipeline_mode = #tpu.pipeline_mode<synchronous>, transform_indices = @transform_17, window_bounds = array<i64: 1, 128>}, {pipeline_mode = #tpu.pipeline_mode<synchronous>, transform_indices = @transform_18, window_bounds = array<i64: 1, 128>}, {pipeline_mode = #tpu.pipeline_mode<synchronous>, transform_indices = @transform_19, window_bounds = array<i64: 1, 128>}, {pipeline_mode = #tpu.pipeline_mode<synchronous>, transform_indices = @transform_20, window_bounds = array<i64: 128, 128>}, {pipeline_mode = #tpu.pipeline_mode<synchronous>, transform_indices = @transform_21, window_bounds = array<i64: 1, 128>}, {pipeline_mode = #tpu.pipeline_mode<synchronous>, transform_indices = @transform_22, window_bounds = array<i64: 1, 128>}, {pipeline_mode = #tpu.pipeline_mode<synchronous>, transform_indices = @transform_23, window_bounds = array<i64: 1, 128>}, {pipeline_mode = #tpu.pipeline_mode<synchronous>, transform_indices = @transform_24, window_bounds = array<i64: 128, 128>}, {pipeline_mode = #tpu.pipeline_mode<synchronous>, transform_indices = @transform_25, window_bounds = array<i64: 1, 128>}, {pipeline_mode = #tpu.pipeline_mode<synchronous>, transform_indices = @transform_26, window_bounds = array<i64: 128, 128>}, {pipeline_mode = #tpu.pipeline_mode<synchronous>, transform_indices = @transform_27, window_bounds = array<i64: 1, 128>}, {pipeline_mode = #tpu.pipeline_mode<synchronous>, transform_indices = @transform_28, window_bounds = array<i64: 128, 128>}, {pipeline_mode = #tpu.pipeline_mode<synchronous>, transform_indices = @transform_29, window_bounds = array<i64: 1, 128>}, {transform_indices = @transform_30, window_bounds = array<i64: 1, 1, 128>}]} {
    %c0 = arith.constant 0 : index
    %c0_0 = arith.constant 0 : index
    %c0_1 = arith.constant 0 : index
    %0 = vector.load %arg1[%c0, %c0_0, %c0_1] : memref<1x8x128xf32, #tpu.memory_space<vmem>>, vector<1x8x128xf32>
    %1 = vector.shape_cast %0 : vector<1x8x128xf32> to vector<8x128xf32>
    %c0_2 = arith.constant 0 : index
    %c0_3 = arith.constant 0 : index
    %2 = vector.load %arg3[%c0_2, %c0_3] : memref<1x128xf32, #tpu.memory_space<vmem>>, vector<1x128xf32>
    %c0_4 = arith.constant 0 : index
    %c0_5 = arith.constant 0 : index
    %3 = vector.load %arg4[%c0_4, %c0_5] : memref<1x128xf32, #tpu.memory_space<vmem>>, vector<1x128xf32>
    %cst = arith.constant dense<0.000000e+00> : vector<8xf32>
    %4 = vector.multi_reduction <add>, %1, %cst [1] : vector<8x128xf32> to vector<8xf32>
    %5 = vector.shape_cast %4 : vector<8xf32> to vector<8x1xf32>
    %6 = arith.mulf %1, %1 : vector<8x128xf32>
    %cst_6 = arith.constant dense<0.000000e+00> : vector<8xf32>
    %7 = vector.multi_reduction <add>, %6, %cst_6 [1] : vector<8x128xf32> to vector<8xf32>
    %8 = vector.shape_cast %7 : vector<8xf32> to vector<8x1xf32>
    %cst_7 = arith.constant 3.125000e-02 : f32
    %9 = vector.broadcast %cst_7 : f32 to vector<8x1xf32>
    %10 = arith.mulf %5, %9 : vector<8x1xf32>
    %cst_8 = arith.constant 3.125000e-02 : f32
    %11 = vector.broadcast %cst_8 : f32 to vector<8x1xf32>
    %12 = arith.mulf %8, %11 : vector<8x1xf32>
    %13 = arith.mulf %10, %10 : vector<8x1xf32>
    %14 = arith.subf %12, %13 : vector<8x1xf32>
    %15 = vector.broadcast %10 : vector<8x1xf32> to vector<8x128xf32>
    %16 = arith.subf %1, %15 : vector<8x128xf32>
    %cst_9 = arith.constant 9.99999974E-6 : f32
    %17 = vector.broadcast %cst_9 : f32 to vector<8x1xf32>
    %18 = arith.addf %14, %17 : vector<8x1xf32>
    %19 = math.rsqrt %18 : vector<8x1xf32>
    %20 = vector.broadcast %19 : vector<8x1xf32> to vector<8x128xf32>
    %21 = arith.mulf %16, %20 : vector<8x128xf32>
    %22 = vector.broadcast %2 : vector<1x128xf32> to vector<8x128xf32>
    %23 = arith.mulf %21, %22 : vector<8x128xf32>
    %24 = vector.broadcast %3 : vector<1x128xf32> to vector<8x128xf32>
    %25 = arith.addf %23, %24 : vector<8x128xf32>
    %c0_10 = arith.constant 0 : index
    %c0_11 = arith.constant 0 : index
    %26 = vector.load %arg5[%c0_10, %c0_11] : memref<128x128xf32, #tpu.memory_space<vmem>>, vector<128x128xf32>
    %cst_12 = arith.constant dense<0.000000e+00> : vector<8x128xf32>
    %27 = tpu.matmul %25, %26, %cst_12 {dimension_numbers = #tpu.dot_dimension_numbers<[1], [0], [0], [1], [0, 0, 1, 1], [], []>} : vector<8x128xf32>, vector<128x128xf32>, vector<8x128xf32> -> vector<8x128xf32>
    %c0_13 = arith.constant 0 : index
    %c0_14 = arith.constant 0 : index
    %28 = vector.load %arg6[%c0_13, %c0_14] : memref<1x128xf32, #tpu.memory_space<vmem>>, vector<1x128xf32>
    %29 = vector.broadcast %28 : vector<1x128xf32> to vector<8x128xf32>
    %30 = arith.addf %27, %29 : vector<8x128xf32>
    %cst_15 = arith.constant 0.176776692 : f32
    %31 = vector.broadcast %cst_15 : f32 to vector<8x128xf32>
    %32 = arith.mulf %30, %31 : vector<8x128xf32>
    %c0_16 = arith.constant 0 : index
    %c0_17 = arith.constant 0 : index
    %33 = vector.load %arg7[%c0_16, %c0_17] : memref<128x128xf32, #tpu.memory_space<vmem>>, vector<128x128xf32>
    %cst_18 = arith.constant dense<0.000000e+00> : vector<8x128xf32>
    %34 = tpu.matmul %25, %33, %cst_18 {dimension_numbers = #tpu.dot_dimension_numbers<[1], [0], [0], [1], [0, 0, 1, 1], [], []>} : vector<8x128xf32>, vector<128x128xf32>, vector<8x128xf32> -> vector<8x128xf32>
    %c0_19 = arith.constant 0 : index
    %c0_20 = arith.constant 0 : index
    %35 = vector.load %arg8[%c0_19, %c0_20] : memref<1x128xf32, #tpu.memory_space<vmem>>, vector<1x128xf32>
    %36 = vector.broadcast %35 : vector<1x128xf32> to vector<8x128xf32>
    %37 = arith.addf %34, %36 : vector<8x128xf32>
    %c0_21 = arith.constant 0 : index
    %c0_22 = arith.constant 0 : index
    %38 = vector.load %arg9[%c0_21, %c0_22] : memref<128x128xf32, #tpu.memory_space<vmem>>, vector<128x128xf32>
    %cst_23 = arith.constant dense<0.000000e+00> : vector<8x128xf32>
    %39 = tpu.matmul %25, %38, %cst_23 {dimension_numbers = #tpu.dot_dimension_numbers<[1], [0], [0], [1], [0, 0, 1, 1], [], []>} : vector<8x128xf32>, vector<128x128xf32>, vector<8x128xf32> -> vector<8x128xf32>
    %c0_24 = arith.constant 0 : index
    %c0_25 = arith.constant 0 : index
    %40 = vector.load %arg10[%c0_24, %c0_25] : memref<1x128xf32, #tpu.memory_space<vmem>>, vector<1x128xf32>
    %41 = vector.broadcast %40 : vector<1x128xf32> to vector<8x128xf32>
    %42 = arith.addf %39, %41 : vector<8x128xf32>
    %cst_26 = arith.constant dense<0.000000e+00> : vector<8x8xf32>
    %43 = tpu.matmul %32, %37, %cst_26 {dimension_numbers = #tpu.dot_dimension_numbers<[1], [1], [0], [0], [0, 0, 1, 0], [], []>} : vector<8x128xf32>, vector<8x128xf32>, vector<8x8xf32> -> vector<8x8xf32>
    %c0_27 = arith.constant 0 : index
    %c0_28 = arith.constant 0 : index
    %c0_29 = arith.constant 0 : index
    %44 = vector.load %arg2[%c0_27, %c0_28, %c0_29] : memref<1x1x8xf32, #tpu.memory_space<vmem>>, vector<1x1x8xf32>
    %45 = vector.shape_cast %44 : vector<1x1x8xf32> to vector<1x8xf32>
    %cst_30 = arith.constant 1.000000e+00 : f32
    %46 = vector.broadcast %cst_30 : f32 to vector<1x8xf32>
    %47 = arith.subf %46, %45 : vector<1x8xf32>
    %cst_31 = arith.constant -1.000000e+09 : f32
    %48 = vector.broadcast %cst_31 : f32 to vector<1x8xf32>
    %49 = arith.mulf %47, %48 : vector<1x8xf32>
    %50 = vector.broadcast %49 : vector<1x8xf32> to vector<8x8xf32>
    %51 = arith.addf %43, %50 : vector<8x8xf32>
    %cst_32 = arith.constant dense<0xFF800000> : vector<8xf32>
    %52 = vector.multi_reduction <maximumf>, %51, %cst_32 [1] : vector<8x8xf32> to vector<8xf32>
    %53 = vector.shape_cast %52 : vector<8xf32> to vector<8x1xf32>
    %54 = vector.broadcast %53 : vector<8x1xf32> to vector<8x8xf32>
    %55 = arith.subf %51, %54 : vector<8x8xf32>
    %56 = math.exp %55 : vector<8x8xf32>
    %cst_33 = arith.constant dense<0.000000e+00> : vector<8xf32>
    %57 = vector.multi_reduction <add>, %56, %cst_33 [1] : vector<8x8xf32> to vector<8xf32>
    %58 = vector.shape_cast %57 : vector<8xf32> to vector<8x1xf32>
    %59 = tpu.reciprocal %58 {approx = true} : vector<8x1xf32> -> vector<8x1xf32>
    %60 = vector.broadcast %59 : vector<8x1xf32> to vector<8x8xf32>
    %61 = arith.mulf %56, %60 : vector<8x8xf32>
    %cst_34 = arith.constant dense<0.000000e+00> : vector<8x128xf32>
    %62 = tpu.matmul %61, %42, %cst_34 {dimension_numbers = #tpu.dot_dimension_numbers<[1], [0], [0], [1], [0, 0, 1, 1], [], []>} : vector<8x8xf32>, vector<8x128xf32>, vector<8x128xf32> -> vector<8x128xf32>
    %c0_35 = arith.constant 0 : index
    %c0_36 = arith.constant 0 : index
    %63 = vector.load %arg11[%c0_35, %c0_36] : memref<128x128xf32, #tpu.memory_space<vmem>>, vector<128x128xf32>
    %cst_37 = arith.constant dense<0.000000e+00> : vector<8x128xf32>
    %64 = tpu.matmul %62, %63, %cst_37 {dimension_numbers = #tpu.dot_dimension_numbers<[1], [0], [0], [1], [0, 0, 1, 1], [], []>} : vector<8x128xf32>, vector<128x128xf32>, vector<8x128xf32> -> vector<8x128xf32>
    %c0_38 = arith.constant 0 : index
    %c0_39 = arith.constant 0 : index
    %65 = vector.load %arg12[%c0_38, %c0_39] : memref<1x128xf32, #tpu.memory_space<vmem>>, vector<1x128xf32>
    %66 = vector.broadcast %65 : vector<1x128xf32> to vector<8x128xf32>
    %67 = arith.addf %64, %66 : vector<8x128xf32>
    %68 = arith.addf %25, %67 : vector<8x128xf32>
    %c0_40 = arith.constant 0 : index
    %c0_41 = arith.constant 0 : index
    %69 = vector.load %arg13[%c0_40, %c0_41] : memref<1x128xf32, #tpu.memory_space<vmem>>, vector<1x128xf32>
    %c0_42 = arith.constant 0 : index
    %c0_43 = arith.constant 0 : index
    %70 = vector.load %arg14[%c0_42, %c0_43] : memref<1x128xf32, #tpu.memory_space<vmem>>, vector<1x128xf32>
    %cst_44 = arith.constant dense<0.000000e+00> : vector<8xf32>
    %71 = vector.multi_reduction <add>, %68, %cst_44 [1] : vector<8x128xf32> to vector<8xf32>
    %72 = vector.shape_cast %71 : vector<8xf32> to vector<8x1xf32>
    %73 = arith.mulf %68, %68 : vector<8x128xf32>
    %cst_45 = arith.constant dense<0.000000e+00> : vector<8xf32>
    %74 = vector.multi_reduction <add>, %73, %cst_45 [1] : vector<8x128xf32> to vector<8xf32>
    %75 = vector.shape_cast %74 : vector<8xf32> to vector<8x1xf32>
    %cst_46 = arith.constant 3.125000e-02 : f32
    %76 = vector.broadcast %cst_46 : f32 to vector<8x1xf32>
    %77 = arith.mulf %72, %76 : vector<8x1xf32>
    %cst_47 = arith.constant 3.125000e-02 : f32
    %78 = vector.broadcast %cst_47 : f32 to vector<8x1xf32>
    %79 = arith.mulf %75, %78 : vector<8x1xf32>
    %80 = arith.mulf %77, %77 : vector<8x1xf32>
    %81 = arith.subf %79, %80 : vector<8x1xf32>
    %82 = vector.broadcast %77 : vector<8x1xf32> to vector<8x128xf32>
    %83 = arith.subf %68, %82 : vector<8x128xf32>
    %cst_48 = arith.constant 9.99999974E-6 : f32
    %84 = vector.broadcast %cst_48 : f32 to vector<8x1xf32>
    %85 = arith.addf %81, %84 : vector<8x1xf32>
    %86 = math.rsqrt %85 : vector<8x1xf32>
    %87 = vector.broadcast %86 : vector<8x1xf32> to vector<8x128xf32>
    %88 = arith.mulf %83, %87 : vector<8x128xf32>
    %89 = vector.broadcast %69 : vector<1x128xf32> to vector<8x128xf32>
    %90 = arith.mulf %88, %89 : vector<8x128xf32>
    %91 = vector.broadcast %70 : vector<1x128xf32> to vector<8x128xf32>
    %92 = arith.addf %90, %91 : vector<8x128xf32>
    %c0_49 = arith.constant 0 : index
    %c0_50 = arith.constant 0 : index
    %93 = vector.load %arg15[%c0_49, %c0_50] : memref<128x128xf32, #tpu.memory_space<vmem>>, vector<128x128xf32>
    %cst_51 = arith.constant dense<0.000000e+00> : vector<8x128xf32>
    %94 = tpu.matmul %92, %93, %cst_51 {dimension_numbers = #tpu.dot_dimension_numbers<[1], [0], [0], [1], [0, 0, 1, 1], [], []>} : vector<8x128xf32>, vector<128x128xf32>, vector<8x128xf32> -> vector<8x128xf32>
    %c0_52 = arith.constant 0 : index
    %c0_53 = arith.constant 0 : index
    %95 = vector.load %arg16[%c0_52, %c0_53] : memref<1x128xf32, #tpu.memory_space<vmem>>, vector<1x128xf32>
    %96 = vector.broadcast %95 : vector<1x128xf32> to vector<8x128xf32>
    %97 = arith.addf %94, %96 : vector<8x128xf32>
    %cst_54 = arith.constant 5.000000e-01 : f32
    %98 = vector.broadcast %cst_54 : f32 to vector<8x128xf32>
    %99 = arith.mulf %98, %97 : vector<8x128xf32>
    %cst_55 = arith.constant 0.707106769 : f32
    %100 = vector.broadcast %cst_55 : f32 to vector<8x128xf32>
    %101 = arith.mulf %97, %100 : vector<8x128xf32>
    %102 = math.erf %101 : vector<8x128xf32>
    %cst_56 = arith.constant 1.000000e+00 : f32
    %103 = vector.broadcast %cst_56 : f32 to vector<8x128xf32>
    %104 = arith.addf %103, %102 : vector<8x128xf32>
    %105 = arith.mulf %99, %104 : vector<8x128xf32>
    %c0_57 = arith.constant 0 : index
    %c0_58 = arith.constant 0 : index
    %106 = vector.load %arg17[%c0_57, %c0_58] : memref<128x128xf32, #tpu.memory_space<vmem>>, vector<128x128xf32>
    %cst_59 = arith.constant dense<0.000000e+00> : vector<8x128xf32>
    %107 = tpu.matmul %105, %106, %cst_59 {dimension_numbers = #tpu.dot_dimension_numbers<[1], [0], [0], [1], [0, 0, 1, 1], [], []>} : vector<8x128xf32>, vector<128x128xf32>, vector<8x128xf32> -> vector<8x128xf32>
    %c0_60 = arith.constant 0 : index
    %c0_61 = arith.constant 0 : index
    %108 = vector.load %arg18[%c0_60, %c0_61] : memref<1x128xf32, #tpu.memory_space<vmem>>, vector<1x128xf32>
    %109 = vector.broadcast %108 : vector<1x128xf32> to vector<8x128xf32>
    %110 = arith.addf %107, %109 : vector<8x128xf32>
    %111 = arith.addf %92, %110 : vector<8x128xf32>
    %c0_62 = arith.constant 0 : index
    %c0_63 = arith.constant 0 : index
    %112 = vector.load %arg19[%c0_62, %c0_63] : memref<1x128xf32, #tpu.memory_space<vmem>>, vector<1x128xf32>
    %c0_64 = arith.constant 0 : index
    %c0_65 = arith.constant 0 : index
    %113 = vector.load %arg20[%c0_64, %c0_65] : memref<1x128xf32, #tpu.memory_space<vmem>>, vector<1x128xf32>
    %cst_66 = arith.constant dense<0.000000e+00> : vector<8xf32>
    %114 = vector.multi_reduction <add>, %111, %cst_66 [1] : vector<8x128xf32> to vector<8xf32>
    %115 = vector.shape_cast %114 : vector<8xf32> to vector<8x1xf32>
    %116 = arith.mulf %111, %111 : vector<8x128xf32>
    %cst_67 = arith.constant dense<0.000000e+00> : vector<8xf32>
    %117 = vector.multi_reduction <add>, %116, %cst_67 [1] : vector<8x128xf32> to vector<8xf32>
    %118 = vector.shape_cast %117 : vector<8xf32> to vector<8x1xf32>
    %cst_68 = arith.constant 3.125000e-02 : f32
    %119 = vector.broadcast %cst_68 : f32 to vector<8x1xf32>
    %120 = arith.mulf %115, %119 : vector<8x1xf32>
    %cst_69 = arith.constant 3.125000e-02 : f32
    %121 = vector.broadcast %cst_69 : f32 to vector<8x1xf32>
    %122 = arith.mulf %118, %121 : vector<8x1xf32>
    %123 = arith.mulf %120, %120 : vector<8x1xf32>
    %124 = arith.subf %122, %123 : vector<8x1xf32>
    %125 = vector.broadcast %120 : vector<8x1xf32> to vector<8x128xf32>
    %126 = arith.subf %111, %125 : vector<8x128xf32>
    %cst_70 = arith.constant 9.99999974E-6 : f32
    %127 = vector.broadcast %cst_70 : f32 to vector<8x1xf32>
    %128 = arith.addf %124, %127 : vector<8x1xf32>
    %129 = math.rsqrt %128 : vector<8x1xf32>
    %130 = vector.broadcast %129 : vector<8x1xf32> to vector<8x128xf32>
    %131 = arith.mulf %126, %130 : vector<8x128xf32>
    %132 = vector.broadcast %112 : vector<1x128xf32> to vector<8x128xf32>
    %133 = arith.mulf %131, %132 : vector<8x128xf32>
    %134 = vector.broadcast %113 : vector<1x128xf32> to vector<8x128xf32>
    %135 = arith.addf %133, %134 : vector<8x128xf32>
    %136 = vector.extract_strided_slice %135 {offsets = [0, 0], sizes = [1, 128], strides = [1, 1]} : vector<8x128xf32> to vector<1x128xf32>
    %c0_71 = arith.constant 0 : index
    %c0_72 = arith.constant 0 : index
    %137 = vector.load %arg21[%c0_71, %c0_72] : memref<128x128xf32, #tpu.memory_space<vmem>>, vector<128x128xf32>
    %cst_73 = arith.constant dense<0.000000e+00> : vector<1x128xf32>
    %138 = tpu.matmul %136, %137, %cst_73 {dimension_numbers = #tpu.dot_dimension_numbers<[1], [0], [0], [1], [0, 0, 1, 1], [], []>} : vector<1x128xf32>, vector<128x128xf32>, vector<1x128xf32> -> vector<1x128xf32>
    %c0_74 = arith.constant 0 : index
    %c0_75 = arith.constant 0 : index
    %139 = vector.load %arg22[%c0_74, %c0_75] : memref<1x128xf32, #tpu.memory_space<vmem>>, vector<1x128xf32>
    %140 = arith.addf %138, %139 : vector<1x128xf32>
    %141 = math.tanh %140 : vector<1x128xf32>
    %c0_76 = arith.constant 0 : index
    %c0_77 = arith.constant 0 : index
    %142 = vector.load %arg23[%c0_76, %c0_77] : memref<1x128xf32, #tpu.memory_space<vmem>>, vector<1x128xf32>
    %c0_78 = arith.constant 0 : index
    %c0_79 = arith.constant 0 : index
    %143 = vector.load %arg24[%c0_78, %c0_79] : memref<1x128xf32, #tpu.memory_space<vmem>>, vector<1x128xf32>
    %cst_80 = arith.constant dense<0.000000e+00> : vector<1xf32>
    %144 = vector.multi_reduction <add>, %141, %cst_80 [1] : vector<1x128xf32> to vector<1xf32>
    %145 = vector.shape_cast %144 : vector<1xf32> to vector<1x1xf32>
    %146 = arith.mulf %141, %141 : vector<1x128xf32>
    %cst_81 = arith.constant dense<0.000000e+00> : vector<1xf32>
    %147 = vector.multi_reduction <add>, %146, %cst_81 [1] : vector<1x128xf32> to vector<1xf32>
    %148 = vector.shape_cast %147 : vector<1xf32> to vector<1x1xf32>
    %cst_82 = arith.constant 3.125000e-02 : f32
    %149 = vector.broadcast %cst_82 : f32 to vector<1x1xf32>
    %150 = arith.mulf %145, %149 : vector<1x1xf32>
    %cst_83 = arith.constant 3.125000e-02 : f32
    %151 = vector.broadcast %cst_83 : f32 to vector<1x1xf32>
    %152 = arith.mulf %148, %151 : vector<1x1xf32>
    %153 = arith.mulf %150, %150 : vector<1x1xf32>
    %154 = arith.subf %152, %153 : vector<1x1xf32>
    %155 = vector.broadcast %150 : vector<1x1xf32> to vector<1x128xf32>
    %156 = arith.subf %141, %155 : vector<1x128xf32>
    %cst_84 = arith.constant 9.99999974E-6 : f32
    %157 = vector.broadcast %cst_84 : f32 to vector<1x1xf32>
    %158 = arith.addf %154, %157 : vector<1x1xf32>
    %159 = math.rsqrt %158 : vector<1x1xf32>
    %160 = vector.broadcast %159 : vector<1x1xf32> to vector<1x128xf32>
    %161 = arith.mulf %156, %160 : vector<1x128xf32>
    %162 = arith.mulf %161, %142 : vector<1x128xf32>
    %163 = arith.addf %162, %143 : vector<1x128xf32>
    %c0_85 = arith.constant 0 : index
    %c0_86 = arith.constant 0 : index
    %164 = vector.load %arg25[%c0_85, %c0_86] : memref<128x128xf32, #tpu.memory_space<vmem>>, vector<128x128xf32>
    %cst_87 = arith.constant dense<0.000000e+00> : vector<1x128xf32>
    %165 = tpu.matmul %163, %164, %cst_87 {dimension_numbers = #tpu.dot_dimension_numbers<[1], [0], [0], [1], [0, 0, 1, 1], [], []>} : vector<1x128xf32>, vector<128x128xf32>, vector<1x128xf32> -> vector<1x128xf32>
    %c0_88 = arith.constant 0 : index
    %c0_89 = arith.constant 0 : index
    %166 = vector.load %arg26[%c0_88, %c0_89] : memref<1x128xf32, #tpu.memory_space<vmem>>, vector<1x128xf32>
    %167 = arith.addf %165, %166 : vector<1x128xf32>
    %cst_90 = arith.constant 5.000000e-01 : f32
    %168 = vector.broadcast %cst_90 : f32 to vector<1x128xf32>
    %169 = arith.mulf %168, %167 : vector<1x128xf32>
    %cst_91 = arith.constant 0.707106769 : f32
    %170 = vector.broadcast %cst_91 : f32 to vector<1x128xf32>
    %171 = arith.mulf %167, %170 : vector<1x128xf32>
    %172 = math.erf %171 : vector<1x128xf32>
    %cst_92 = arith.constant 1.000000e+00 : f32
    %173 = vector.broadcast %cst_92 : f32 to vector<1x128xf32>
    %174 = arith.addf %173, %172 : vector<1x128xf32>
    %175 = arith.mulf %169, %174 : vector<1x128xf32>
    %176 = arith.addf %175, %163 : vector<1x128xf32>
    %c0_93 = arith.constant 0 : index
    %c0_94 = arith.constant 0 : index
    %177 = vector.load %arg27[%c0_93, %c0_94] : memref<128x128xf32, #tpu.memory_space<vmem>>, vector<128x128xf32>
    %cst_95 = arith.constant dense<0.000000e+00> : vector<1x128xf32>
    %178 = tpu.matmul %176, %177, %cst_95 {dimension_numbers = #tpu.dot_dimension_numbers<[1], [0], [0], [1], [0, 0, 1, 1], [], []>} : vector<1x128xf32>, vector<128x128xf32>, vector<1x128xf32> -> vector<1x128xf32>
    %c0_96 = arith.constant 0 : index
    %c0_97 = arith.constant 0 : index
    %179 = vector.load %arg28[%c0_96, %c0_97] : memref<1x128xf32, #tpu.memory_space<vmem>>, vector<1x128xf32>
    %180 = arith.addf %178, %179 : vector<1x128xf32>
    %cst_98 = arith.constant 5.000000e-01 : f32
    %181 = vector.broadcast %cst_98 : f32 to vector<1x128xf32>
    %182 = arith.mulf %181, %180 : vector<1x128xf32>
    %cst_99 = arith.constant 0.707106769 : f32
    %183 = vector.broadcast %cst_99 : f32 to vector<1x128xf32>
    %184 = arith.mulf %180, %183 : vector<1x128xf32>
    %185 = math.erf %184 : vector<1x128xf32>
    %cst_100 = arith.constant 1.000000e+00 : f32
    %186 = vector.broadcast %cst_100 : f32 to vector<1x128xf32>
    %187 = arith.addf %186, %185 : vector<1x128xf32>
    %188 = arith.mulf %182, %187 : vector<1x128xf32>
    %189 = arith.addf %188, %176 : vector<1x128xf32>
    %c0_101 = arith.constant 0 : index
    %c0_102 = arith.constant 0 : index
    %190 = vector.load %arg29[%c0_101, %c0_102] : memref<128x128xf32, #tpu.memory_space<vmem>>, vector<128x128xf32>
    %cst_103 = arith.constant dense<0.000000e+00> : vector<1x128xf32>
    %191 = tpu.matmul %189, %190, %cst_103 {dimension_numbers = #tpu.dot_dimension_numbers<[1], [0], [0], [1], [0, 0, 1, 1], [], []>} : vector<1x128xf32>, vector<128x128xf32>, vector<1x128xf32> -> vector<1x128xf32>
    %c0_104 = arith.constant 0 : index
    %c0_105 = arith.constant 0 : index
    %192 = vector.load %arg30[%c0_104, %c0_105] : memref<1x128xf32, #tpu.memory_space<vmem>>, vector<1x128xf32>
    %193 = arith.addf %191, %192 : vector<1x128xf32>
    %c0_106 = arith.constant 0 : index
    %c0_107 = arith.constant 0 : index
    %c0_108 = arith.constant 0 : index
    %194 = vector.load %arg31[%c0_106, %c0_107, %c0_108] : memref<1x1x128xf32, #tpu.memory_space<vmem>>, vector<1x1x128xf32>
    %195 = vector.shape_cast %194 : vector<1x1x128xf32> to vector<1x128xf32>
    %196 = vector.shape_cast %193 : vector<1x128xf32> to vector<1x1x128xf32>
    tpu.vector_store %arg31[%c0_106, %c0_107, %c0_108], %196 {strides = array<i32>} : memref<1x1x128xf32, #tpu.memory_space<vmem>>, vector<1x1x128xf32>,
    return
  }
  func.func @transform_0(%arg0: i32) -> (i32, i32, i32) {
    %c0_i32 = arith.constant 0 : i32
    %c0_i32_0 = arith.constant 0 : i32
    %c0_i32_1 = arith.constant 0 : i32
    return %arg0, %c0_i32, %c0_i32_0 : i32, i32, i32
  }
  func.func @transform_1(%arg0: i32) -> (i32, i32, i32) {
    %c0_i32 = arith.constant 0 : i32
    %c0_i32_0 = arith.constant 0 : i32
    %c0_i32_1 = arith.constant 0 : i32
    return %arg0, %c0_i32, %c0_i32_0 : i32, i32, i32
  }
  func.func @transform_2(%arg0: i32) -> (i32, i32) {
    %c0_i32 = arith.constant 0 : i32
    %c0_i32_0 = arith.constant 0 : i32
    %c0_i32_1 = arith.constant 0 : i32
    return %c0_i32, %c0_i32_0 : i32, i32
  }
  func.func @transform_3(%arg0: i32) -> (i32, i32) {
    %c0_i32 = arith.constant 0 : i32
    %c0_i32_0 = arith.constant 0 : i32
    %c0_i32_1 = arith.constant 0 : i32
    return %c0_i32, %c0_i32_0 : i32, i32
  }
  func.func @transform_4(%arg0: i32) -> (i32, i32) {
    %c0_i32 = arith.constant 0 : i32
    %c0_i32_0 = arith.constant 0 : i32
    %c0_i32_1 = arith.constant 0 : i32
    return %c0_i32, %c0_i32_0 : i32, i32
  }
  func.func @transform_5(%arg0: i32) -> (i32, i32) {
    %c0_i32 = arith.constant 0 : i32
    %c0_i32_0 = arith.constant 0 : i32
    %c0_i32_1 = arith.constant 0 : i32
    return %c0_i32, %c0_i32_0 : i32, i32
  }
  func.func @transform_6(%arg0: i32) -> (i32, i32) {
    %c0_i32 = arith.constant 0 : i32
    %c0_i32_0 = arith.constant 0 : i32
    %c0_i32_1 = arith.constant 0 : i32
    return %c0_i32, %c0_i32_0 : i32, i32
  }
  func.func @transform_7(%arg0: i32) -> (i32, i32) {
    %c0_i32 = arith.constant 0 : i32
    %c0_i32_0 = arith.constant 0 : i32
    %c0_i32_1 = arith.constant 0 : i32
    return %c0_i32, %c0_i32_0 : i32, i32
  }
  func.func @transform_8(%arg0: i32) -> (i32, i32) {
    %c0_i32 = arith.constant 0 : i32
    %c0_i32_0 = arith.constant 0 : i32
    %c0_i32_1 = arith.constant 0 : i32
    return %c0_i32, %c0_i32_0 : i32, i32
  }
  func.func @transform_9(%arg0: i32) -> (i32, i32) {
    %c0_i32 = arith.constant 0 : i32
    %c0_i32_0 = arith.constant 0 : i32
    %c0_i32_1 = arith.constant 0 : i32
    return %c0_i32, %c0_i32_0 : i32, i32
  }
  func.func @transform_10(%arg0: i32) -> (i32, i32) {
    %c0_i32 = arith.constant 0 : i32
    %c0_i32_0 = arith.constant 0 : i32
    %c0_i32_1 = arith.constant 0 : i32
    return %c0_i32, %c0_i32_0 : i32, i32
  }
  func.func @transform_11(%arg0: i32) -> (i32, i32) {
    %c0_i32 = arith.constant 0 : i32
    %c0_i32_0 = arith.constant 0 : i32
    %c0_i32_1 = arith.constant 0 : i32
    return %c0_i32, %c0_i32_0 : i32, i32
  }
  func.func @transform_12(%arg0: i32) -> (i32, i32) {
    %c0_i32 = arith.constant 0 : i32
    %c0_i32_0 = arith.constant 0 : i32
    %c0_i32_1 = arith.constant 0 : i32
    return %c0_i32, %c0_i32_0 : i32, i32
  }
  func.func @transform_13(%arg0: i32) -> (i32, i32) {
    %c0_i32 = arith.constant 0 : i32
    %c0_i32_0 = arith.constant 0 : i32
    %c0_i32_1 = arith.constant 0 : i32
    return %c0_i32, %c0_i32_0 : i32, i32
  }
  func.func @transform_14(%arg0: i32) -> (i32, i32) {
    %c0_i32 = arith.constant 0 : i32
    %c0_i32_0 = arith.constant 0 : i32
    %c0_i32_1 = arith.constant 0 : i32
    return %c0_i32, %c0_i32_0 : i32, i32
  }
  func.func @transform_15(%arg0: i32) -> (i32, i32) {
    %c0_i32 = arith.constant 0 : i32
    %c0_i32_0 = arith.constant 0 : i32
    %c0_i32_1 = arith.constant 0 : i32
    return %c0_i32, %c0_i32_0 : i32, i32
  }
  func.func @transform_16(%arg0: i32) -> (i32, i32) {
    %c0_i32 = arith.constant 0 : i32
    %c0_i32_0 = arith.constant 0 : i32
    %c0_i32_1 = arith.constant 0 : i32
    return %c0_i32, %c0_i32_0 : i32, i32
  }
  func.func @transform_17(%arg0: i32) -> (i32, i32) {
    %c0_i32 = arith.constant 0 : i32
    %c0_i32_0 = arith.constant 0 : i32
    %c0_i32_1 = arith.constant 0 : i32
    return %c0_i32, %c0_i32_0 : i32, i32
  }
  func.func @transform_18(%arg0: i32) -> (i32, i32) {
    %c0_i32 = arith.constant 0 : i32
    %c0_i32_0 = arith.constant 0 : i32
    %c0_i32_1 = arith.constant 0 : i32
    return %c0_i32, %c0_i32_0 : i32, i32
  }
  func.func @transform_19(%arg0: i32) -> (i32, i32) {
    %c0_i32 = arith.constant 0 : i32
    %c0_i32_0 = arith.constant 0 : i32
    %c0_i32_1 = arith.constant 0 : i32
    return %c0_i32, %c0_i32_0 : i32, i32
  }
  func.func @transform_20(%arg0: i32) -> (i32, i32) {
    %c0_i32 = arith.constant 0 : i32
    %c0_i32_0 = arith.constant 0 : i32
    %c0_i32_1 = arith.constant 0 : i32
    return %c0_i32, %c0_i32_0 : i32, i32
  }
  func.func @transform_21(%arg0: i32) -> (i32, i32) {
    %c0_i32 = arith.constant 0 : i32
    %c0_i32_0 = arith.constant 0 : i32
    %c0_i32_1 = arith.constant 0 : i32
    return %c0_i32, %c0_i32_0 : i32, i32
  }
  func.func @transform_22(%arg0: i32) -> (i32, i32) {
    %c0_i32 = arith.constant 0 : i32
    %c0_i32_0 = arith.constant 0 : i32
    %c0_i32_1 = arith.constant 0 : i32
    return %c0_i32, %c0_i32_0 : i32, i32
  }
  func.func @transform_23(%arg0: i32) -> (i32, i32) {
    %c0_i32 = arith.constant 0 : i32
    %c0_i32_0 = arith.constant 0 : i32
    %c0_i32_1 = arith.constant 0 : i32
    return %c0_i32, %c0_i32_0 : i32, i32
  }
  func.func @transform_24(%arg0: i32) -> (i32, i32) {
    %c0_i32 = arith.constant 0 : i32
    %c0_i32_0 = arith.constant 0 : i32
    %c0_i32_1 = arith.constant 0 : i32
    return %c0_i32, %c0_i32_0 : i32, i32
  }
  func.func @transform_25(%arg0: i32) -> (i32, i32) {
    %c0_i32 = arith.constant 0 : i32
    %c0_i32_0 = arith.constant 0 : i32
    %c0_i32_1 = arith.constant 0 : i32
    return %c0_i32, %c0_i32_0 : i32, i32
  }
  func.func @transform_26(%arg0: i32) -> (i32, i32) {
    %c0_i32 = arith.constant 0 : i32
    %c0_i32_0 = arith.constant 0 : i32
    %c0_i32_1 = arith.constant 0 : i32
    return %c0_i32, %c0_i32_0 : i32, i32
  }
  func.func @transform_27(%arg0: i32) -> (i32, i32) {
    %c0_i32 = arith.constant 0 : i32
    %c0_i32_0 = arith.constant 0 : i32
    %c0_i32_1 = arith.constant 0 : i32
    return %c0_i32, %c0_i32_0 : i32, i32
  }
  func.func @transform_28(%arg0: i32) -> (i32, i32) {
    %c0_i32 = arith.constant 0 : i32
    %c0_i32_0 = arith.constant 0 : i32
    %c0_i32_1 = arith.constant 0 : i32
    return %c0_i32, %c0_i32_0 : i32, i32
  }
  func.func @transform_29(%arg0: i32) -> (i32, i32) {
    %c0_i32 = arith.constant 0 : i32
    %c0_i32_0 = arith.constant 0 : i32
    %c0_i32_1 = arith.constant 0 : i32
    return %c0_i32, %c0_i32_0 : i32, i32
  }
  func.func @transform_30(%arg0: i32) -> (i32, i32, i32) {
    %c0_i32 = arith.constant 0 : i32
    %c0_i32_0 = arith.constant 0 : i32
    %c0_i32_1 = arith.constant 0 : i32
    return %arg0, %c0_i32, %c0_i32_0 : i32, i32, i32
  }
}

</mosaic_0001>

<llo_original>
// kernel: roberta_wrapper_forward.1
$region0: #{roberta_wrapper_forward.1}
  #allocation0 [shape = 'u32[]', space=smem, size = 0x4, offset = 0x4, fixed_abs, tag = 'smem constant byte address 0x4 - core index']
  #allocation1 [shape = 'u32[144,128]{1,0:T(1,128)}', space=vmem, size = 0x12000, scoped, tag = 'internal scratch']
  %s0 = inlined_call_operand.smem [shape: u32[31], index: -1, kind: input, shape index: {}]
  %s1 = sld [smem:[%s0]]
  %s2 = scalar_lea.smem %s0, 1
  %s3 = sld [smem:[%s2]]
  %s4 = scalar_lea.smem %s0, 2
  %s5 = sld [smem:[%s4]]
  %s6 = scalar_lea.smem %s0, 3
  %s7 = sld [smem:[%s6]]
  %s8 = scalar_lea.smem %s0, 4
  %s9 = sld [smem:[%s8]]
  %s10 = scalar_lea.smem %s0, 5
  %s11 = sld [smem:[%s10]]
  %s12 = scalar_lea.smem %s0, 6
  %s13 = sld [smem:[%s12]]
  %s14 = scalar_lea.smem %s0, 7
  %s15 = sld [smem:[%s14]]
  %s16 = scalar_lea.smem %s0, 8
  %s17 = sld [smem:[%s16]]
  %s18 = scalar_lea.smem %s0, 9
  %s19 = sld [smem:[%s18]]
  %s20 = scalar_lea.smem %s0, 10
  %s21 = sld [smem:[%s20]]
  %s22 = scalar_lea.smem %s0, 11
  %s23 = sld [smem:[%s22]]
  %s24 = scalar_lea.smem %s0, 12
  %s25 = sld [smem:[%s24]]
  %s26 = scalar_lea.smem %s0, 13
  %s27 = sld [smem:[%s26]]
  %s28 = scalar_lea.smem %s0, 14
  %s29 = sld [smem:[%s28]]
  %s30 = scalar_lea.smem %s0, 15
  %s31 = sld [smem:[%s30]]
  %s32 = scalar_lea.smem %s0, 16
  %s33 = sld [smem:[%s32]]
  %s34 = scalar_lea.smem %s0, 17
  %s35 = sld [smem:[%s34]]
  %s36 = scalar_lea.smem %s0, 18
  %s37 = sld [smem:[%s36]]
  %s38 = scalar_lea.smem %s0, 19
  %s39 = sld [smem:[%s38]]
  %s40 = scalar_lea.smem %s0, 20
  %s41 = sld [smem:[%s40]]
  %s42 = scalar_lea.smem %s0, 21
  %s43 = sld [smem:[%s42]]
  %s44 = scalar_lea.smem %s0, 22
  %s45 = sld [smem:[%s44]]
  %s46 = scalar_lea.smem %s0, 23
  %s47 = sld [smem:[%s46]]
  %s48 = scalar_lea.smem %s0, 24
  %s49 = sld [smem:[%s48]]
  %s50 = scalar_lea.smem %s0, 25
  %s51 = sld [smem:[%s50]]
  %s52 = scalar_lea.smem %s0, 26
  %s53 = sld [smem:[%s52]]
  %s54 = scalar_lea.smem %s0, 27
  %s55 = sld [smem:[%s54]]
  %s56 = scalar_lea.smem %s0, 28
  %s57 = sld [smem:[%s56]]
  %s58 = scalar_lea.smem %s0, 29
  %s59 = sld [smem:[%s58]]
  %s60 = scalar_lea.smem %s0, 30
  %s61 = sld [smem:[%s60]]
  %s62 = sld [smem:[#allocation0]]
  $region189: #{roberta_wrapper_forward.1} parent=0
    _
  %s64 = ssub.s32 1, %s62
  %s65 = scalar_select 0, %s64, %s62
  $region1: #{roberta_wrapper_forward.1} parent=0
    #allocation2 [shape = 'u8[65536]{0}', space=vmem, size = 0x10000, scoped, tag = 'input window, operand 6, single buffered']
    #allocation3 [shape = 's32[2]{0}', space=sflag, size = 0x8, scoped, tag = 'scoped memory for roberta_wrapper_forward.1']
    #allocation4 [shape = 's32[2]{0}', space=sflag, size = 0x8, scoped, tag = 'scoped memory for roberta_wrapper_forward.1']
    #allocation5 [shape = 'u8[65536]{0}', space=vmem, size = 0x10000, scoped, tag = 'input window, operand 8, single buffered']
    #allocation6 [shape = 's32[1]{0}', space=sflag, size = 0x4, scoped, tag = 'scoped memory for roberta_wrapper_forward.1']
    #allocation7 [shape = 'u8[65536]{0}', space=vmem, size = 0x10000, scoped, tag = 'input window, operand 10, single buffered']
    #allocation8 [shape = 'u8[65536]{0}', space=vmem, size = 0x10000, scoped, tag = 'input window, operand 14, single buffered']
    #allocation9 [shape = 's32[1]{0}', space=sflag, size = 0x4, scoped, tag = 'scoped memory for roberta_wrapper_forward.1']
    #allocation10 [shape = 'u8[65536]{0}', space=vmem, size = 0x10000, scoped, tag = 'input window, operand 16, single buffered']
    #allocation11 [shape = 'u8[65536]{0}', space=vmem, size = 0x10000, scoped, tag = 'input window, operand 20, single buffered']
    #allocation12 [shape = 's32[1]{0}', space=sflag, size = 0x4, scoped, tag = 'scoped memory for roberta_wrapper_forward.1']
    #allocation13 [shape = 'u8[65536]{0}', space=vmem, size = 0x10000, scoped, tag = 'input window, operand 24, single buffered']
    #allocation14 [shape = 'u8[65536]{0}', space=vmem, size = 0x10000, scoped, tag = 'input window, operand 26, single buffered']
    #allocation15 [shape = 's32[1]{0}', space=sflag, size = 0x4, scoped, tag = 'scoped memory for roberta_wrapper_forward.1']
    #allocation16 [shape = 'u8[65536]{0}', space=vmem, size = 0x10000, scoped, tag = 'input window, operand 28, single buffered']
    #allocation17 [shape = 'u8[1024]{0}', space=vmem, size = 0x400, scoped, tag = 'output window, operand 0']
    %66 = vsyncpa [#allocation3], 0
    %67 = vsyncpa [#allocation6], 0
    %68 = vsyncpa [#allocation9], 0
    %69 = vsyncpa [#allocation12], 0
    %70 = vsyncpa [#allocation15], 0
    %71 = vsyncpa [#allocation4], 0
    %s72 = scalar_lea.sflag [#allocation4], 1
    %73 = vsyncpa %s72, 0
    loop: start=0, step=1, limit=4
    $region2: #{roberta_wrapper_forward.1} parent=1 // loop_pre_header
      _
    $region3: #{roberta_wrapper_forward.1} parent=1 // loop_header
      %s75 = sphi 0, %s79
      %p76 = scmp.ge.s32.totalorder %s75, 4
      %s85 = sphi 0, %s87
      %s88 = sphi 0, %s85
      %s89 = sphi 0, %s88
      %s105 = sphi 0, %s89
      %s111 = sphi 0, %s113
      %s114 = sphi 0, %s111
      %s115 = sphi 0, %s114
      %s131 = sphi 0, %s115
      %s135 = sphi 0, %s135
      %s137 = sphi 0, %s135
      %s138 = sphi 0, %s137
      %s152 = sphi 0, %s138
      %s156 = sphi 0, %s156
      %s158 = sphi 0, %s156
      %s159 = sphi 0, %s158
      %s173 = sphi 0, %s159
      %s177 = sphi 0, %s177
      %s179 = sphi 0, %s177
      %s180 = sphi 0, %s179
      %s194 = sphi 0, %s180
      %s198 = sphi 0, %s198
      %s200 = sphi 0, %s198
      %s201 = sphi 0, %s200
      %s215 = sphi 0, %s201
      %s219 = sphi 0, %s219
      %s221 = sphi 0, %s219
      %s222 = sphi 0, %s221
      %s236 = sphi 0, %s222
      %s240 = sphi 0, %s240
      %s242 = sphi 0, %s240
      %s243 = sphi 0, %s242
      %s257 = sphi 0, %s243
      %s261 = sphi 0, %s261
      %s263 = sphi 0, %s261
      %s264 = sphi 0, %s263
      %s278 = sphi 0, %s264
      %s282 = sphi 0, %s282
      %s284 = sphi 0, %s282
      %s285 = sphi 0, %s284
      %s299 = sphi 0, %s285
      %s303 = sphi 0, %s303
      %s305 = sphi 0, %s303
      %s306 = sphi 0, %s305
      %s320 = sphi 0, %s306
      %s324 = sphi 0, %s324
      %s326 = sphi 0, %s324
      %s327 = sphi 0, %s326
      %s341 = sphi 0, %s327
      %s345 = sphi 0, %s345
      %s347 = sphi 0, %s345
      %s348 = sphi 0, %s347
      %s362 = sphi 0, %s348
      %s366 = sphi 0, %s366
      %s368 = sphi 0, %s366
      %s369 = sphi 0, %s368
      %s383 = sphi 0, %s369
      %s387 = sphi 0, %s387
      %s389 = sphi 0, %s387
      %s390 = sphi 0, %s389
      %s404 = sphi 0, %s390
      %s408 = sphi 0, %s408
      %s410 = sphi 0, %s408
      %s411 = sphi 0, %s410
      %s425 = sphi 0, %s411
      %s429 = sphi 0, %s429
      %s431 = sphi 0, %s429
      %s432 = sphi 0, %s431
      %s446 = sphi 0, %s432
      %s450 = sphi 0, %s450
      %s452 = sphi 0, %s450
      %s453 = sphi 0, %s452
      %s467 = sphi 0, %s453
      %s471 = sphi 0, %s471
      %s473 = sphi 0, %s471
      %s474 = sphi 0, %s473
      %s488 = sphi 0, %s474
      %s492 = sphi 0, %s492
      %s494 = sphi 0, %s492
      %s495 = sphi 0, %s494
      %s509 = sphi 0, %s495
      %s513 = sphi 0, %s513
      %s515 = sphi 0, %s513
      %s516 = sphi 0, %s515
      %s530 = sphi 0, %s516
      %s534 = sphi 0, %s534
      %s536 = sphi 0, %s534
      %s537 = sphi 0, %s536
      %s551 = sphi 0, %s537
      %s555 = sphi 0, %s555
      %s557 = sphi 0, %s555
      %s558 = sphi 0, %s557
      %s572 = sphi 0, %s558
      %s576 = sphi 0, %s576
      %s578 = sphi 0, %s576
      %s579 = sphi 0, %s578
      %s593 = sphi 0, %s579
      %s597 = sphi 0, %s597
      %s599 = sphi 0, %s597
      %s600 = sphi 0, %s599
      %s614 = sphi 0, %s600
      %s618 = sphi 0, %s618
      %s620 = sphi 0, %s618
      %s621 = sphi 0, %s620
      %s635 = sphi 0, %s621
      %s639 = sphi 0, %s639
      %s641 = sphi 0, %s639
      %s642 = sphi 0, %s641
      %s656 = sphi 0, %s642
      %s660 = sphi 0, %s660
      %s662 = sphi 0, %s660
      %s663 = sphi 0, %s662
      %s677 = sphi 0, %s663
      %s681 = sphi 0, %s681
      %s683 = sphi 0, %s681
      %s684 = sphi 0, %s683
      %s698 = sphi 0, %s684
      %s702 = sphi 0, %s702
      %s704 = sphi 0, %s702
      %s705 = sphi 0, %s704
      %s719 = sphi 0, %s705
      %s725 = sphi 0, %s727
      %s728 = sphi 0, %s725
      %s729 = sphi 0, %s728
      %s745 = sphi 0, %s729
    $region4: #{roberta_wrapper_forward.1} parent=1 // loop_header_branch
      %78 = sbr.rel (%p76) target = $region8
    $region5: #{roberta_wrapper_forward.1} parent=1 // loop_body
      %s80 = ssub.s32 %s75, 1
      %s81 = ssub.s32 %s75, 2
      %s82 = sadd.s32 %s75, 1
      %s83 = ssub.s32 %s75, %s82
      %p84 = scmp.eq.s32.totalorder %s83, 0
      %s86 = sadd.s32 %s85, 1
      %s87 = scalar_select %p84, %s85, %s86
      %p90 = pneg %p84
      %p91 = scmp.eq.s32.totalorder %s75, 1
      %p92 = por %p90, %p91
      %p93 = scmp.ne.s32.totalorder %s85, %s88
      %p94 = scmp.eq.s32.totalorder %s75, 0
      %p95 = por %p93, %p94
      %p96 = scmp.ne.s32.totalorder %s85, %s88
      %p97 = scmp.eq.s32.totalorder %s80, 1
      %p98 = por %p96, %p97
      %p99 = scmp.ne.s32.totalorder %s88, %s89
      %p100 = scmp.eq.s32.totalorder %s80, 0
      %p101 = por %p99, %p100
      %p102 = scmp.ne.s32.totalorder %s88, %s89
      %p103 = scmp.eq.s32.totalorder %s81, 1
      %p104 = por %p102, %p103
      %p106 = scmp.ne.s32.totalorder %s89, %s105
      %p107 = scmp.eq.s32.totalorder %s81, 0
      %p108 = por %p106, %p107
      %s109 = ssub.s32 %s75, %s82
      %p110 = scmp.eq.s32.totalorder %s109, 0
      %s112 = sadd.s32 %s111, 1
      %s113 = scalar_select %p110, %s111, %s112
      %p116 = pneg %p110
      %p117 = scmp.eq.s32.totalorder %s75, 1
      %p118 = por %p116, %p117
      %p119 = scmp.ne.s32.totalorder %s111, %s114
      %p120 = scmp.eq.s32.totalorder %s75, 0
      %p121 = por %p119, %p120
      %p122 = scmp.ne.s32.totalorder %s111, %s114
      %p123 = scmp.eq.s32.totalorder %s80, 1
      %p124 = por %p122, %p123
      %p125 = scmp.ne.s32.totalorder %s114, %s115
      %p126 = scmp.eq.s32.totalorder %s80, 0
      %p127 = por %p125, %p126
      %p128 = scmp.ne.s32.totalorder %s114, %s115
      %p129 = scmp.eq.s32.totalorder %s81, 1
      %p130 = por %p128, %p129
      %p132 = scmp.ne.s32.totalorder %s115, %s131
      %p133 = scmp.eq.s32.totalorder %s81, 0
      %p134 = por %p132, %p133
      %s136 = sadd.s32 %s135, 1
      %p139 = scmp.eq.s32.totalorder %s75, 1
      %p140 = scmp.ne.s32.totalorder %s135, %s137
      %p141 = scmp.eq.s32.totalorder %s75, 0
      %p142 = por %p140, %p141
      %p143 = scmp.ne.s32.totalorder %s135, %s137
      %p144 = scmp.eq.s32.totalorder %s80, 1
      %p145 = por %p143, %p144
      %p146 = scmp.ne.s32.totalorder %s137, %s138
      %p147 = scmp.eq.s32.totalorder %s80, 0
      %p148 = por %p146, %p147
      %p149 = scmp.ne.s32.totalorder %s137, %s138
      %p150 = scmp.eq.s32.totalorder %s81, 1
      %p151 = por %p149, %p150
      %p153 = scmp.ne.s32.totalorder %s138, %s152
      %p154 = scmp.eq.s32.totalorder %s81, 0
      %p155 = por %p153, %p154
      %s157 = sadd.s32 %s156, 1
      %p160 = scmp.eq.s32.totalorder %s75, 1
      %p161 = scmp.ne.s32.totalorder %s156, %s158
      %p162 = scmp.eq.s32.totalorder %s75, 0
      %p163 = por %p161, %p162
      %p164 = scmp.ne.s32.totalorder %s156, %s158
      %p165 = scmp.eq.s32.totalorder %s80, 1
      %p166 = por %p164, %p165
      %p167 = scmp.ne.s32.totalorder %s158, %s159
      %p168 = scmp.eq.s32.totalorder %s80, 0
      %p169 = por %p167, %p168
      %p170 = scmp.ne.s32.totalorder %s158, %s159
      %p171 = scmp.eq.s32.totalorder %s81, 1
      %p172 = por %p170, %p171
      %p174 = scmp.ne.s32.totalorder %s159, %s173
      %p175 = scmp.eq.s32.totalorder %s81, 0
      %p176 = por %p174, %p175
      %s178 = sadd.s32 %s177, 1
      %p181 = scmp.eq.s32.totalorder %s75, 1
      %p182 = scmp.ne.s32.totalorder %s177, %s179
      %p183 = scmp.eq.s32.totalorder %s75, 0
      %p184 = por %p182, %p183
      %p185 = scmp.ne.s32.totalorder %s177, %s179
      %p186 = scmp.eq.s32.totalorder %s80, 1
      %p187 = por %p185, %p186
      %p188 = scmp.ne.s32.totalorder %s179, %s180
      %p189 = scmp.eq.s32.totalorder %s80, 0
      %p190 = por %p188, %p189
      %p191 = scmp.ne.s32.totalorder %s179, %s180
      %p192 = scmp.eq.s32.totalorder %s81, 1
      %p193 = por %p191, %p192
      %p195 = scmp.ne.s32.totalorder %s180, %s194
      %p196 = scmp.eq.s32.totalorder %s81, 0
      %p197 = por %p195, %p196
      %s199 = sadd.s32 %s198, 1
      %p202 = scmp.eq.s32.totalorder %s75, 1
      %p203 = scmp.ne.s32.totalorder %s198, %s200
      %p204 = scmp.eq.s32.totalorder %s75, 0
      %p205 = por %p203, %p204
      %p206 = scmp.ne.s32.totalorder %s198, %s200
      %p207 = scmp.eq.s32.totalorder %s80, 1
      %p208 = por %p206, %p207
      %p209 = scmp.ne.s32.totalorder %s200, %s201
      %p210 = scmp.eq.s32.totalorder %s80, 0
      %p211 = por %p209, %p210
      %p212 = scmp.ne.s32.totalorder %s200, %s201
      %p213 = scmp.eq.s32.totalorder %s81, 1
      %p214 = por %p212, %p213
      %p216 = scmp.ne.s32.totalorder %s201, %s215
      %p217 = scmp.eq.s32.totalorder %s81, 0
      %p218 = por %p216, %p217
      %s220 = sadd.s32 %s219, 1
      %p223 = scmp.eq.s32.totalorder %s75, 1
      %p224 = scmp.ne.s32.totalorder %s219, %s221
      %p225 = scmp.eq.s32.totalorder %s75, 0
      %p226 = por %p224, %p225
      %p227 = scmp.ne.s32.totalorder %s219, %s221
      %p228 = scmp.eq.s32.totalorder %s80, 1
      %p229 = por %p227, %p228
      %p230 = scmp.ne.s32.totalorder %s221, %s222
      %p231 = scmp.eq.s32.totalorder %s80, 0
      %p232 = por %p230, %p231
      %p233 = scmp.ne.s32.totalorder %s221, %s222
      %p234 = scmp.eq.s32.totalorder %s81, 1
      %p235 = por %p233, %p234
      %p237 = scmp.ne.s32.totalorder %s222, %s236
      %p238 = scmp.eq.s32.totalorder %s81, 0
      %p239 = por %p237, %p238
      %s241 = sadd.s32 %s240, 1
      %p244 = scmp.eq.s32.totalorder %s75, 1
      %p245 = scmp.ne.s32.totalorder %s240, %s242
      %p246 = scmp.eq.s32.totalorder %s75, 0
      %p247 = por %p245, %p246
      %p248 = scmp.ne.s32.totalorder %s240, %s242
      %p249 = scmp.eq.s32.totalorder %s80, 1
      %p250 = por %p248, %p249
      %p251 = scmp.ne.s32.totalorder %s242, %s243
      %p252 = scmp.eq.s32.totalorder %s80, 0
      %p253 = por %p251, %p252
      %p254 = scmp.ne.s32.totalorder %s242, %s243
      %p255 = scmp.eq.s32.totalorder %s81, 1
      %p256 = por %p254, %p255
      %p258 = scmp.ne.s32.totalorder %s243, %s257
      %p259 = scmp.eq.s32.totalorder %s81, 0
      %p260 = por %p258, %p259
      %s262 = sadd.s32 %s261, 1
      %p265 = scmp.eq.s32.totalorder %s75, 1
      %p266 = scmp.ne.s32.totalorder %s261, %s263
      %p267 = scmp.eq.s32.totalorder %s75, 0
      %p268 = por %p266, %p267
      %p269 = scmp.ne.s32.totalorder %s261, %s263
      %p270 = scmp.eq.s32.totalorder %s80, 1
      %p271 = por %p269, %p270
      %p272 = scmp.ne.s32.totalorder %s263, %s264
      %p273 = scmp.eq.s32.totalorder %s80, 0
      %p274 = por %p272, %p273
      %p275 = scmp.ne.s32.totalorder %s263, %s264
      %p276 = scmp.eq.s32.totalorder %s81, 1
      %p277 = por %p275, %p276
      %p279 = scmp.ne.s32.totalorder %s264, %s278
      %p280 = scmp.eq.s32.totalorder %s81, 0
      %p281 = por %p279, %p280
      %s283 = sadd.s32 %s282, 1
      %p286 = scmp.eq.s32.totalorder %s75, 1
      %p287 = scmp.ne.s32.totalorder %s282, %s284
      %p288 = scmp.eq.s32.totalorder %s75, 0
      %p289 = por %p287, %p288
      %p290 = scmp.ne.s32.totalorder %s282, %s284
      %p291 = scmp.eq.s32.totalorder %s80, 1
      %p292 = por %p290, %p291
      %p293 = scmp.ne.s32.totalorder %s284, %s285
      %p294 = scmp.eq.s32.totalorder %s80, 0
      %p295 = por %p293, %p294
      %p296 = scmp.ne.s32.totalorder %s284, %s285
      %p297 = scmp.eq.s32.totalorder %s81, 1
      %p298 = por %p296, %p297
      %p300 = scmp.ne.s32.totalorder %s285, %s299
      %p301 = scmp.eq.s32.totalorder %s81, 0
      %p302 = por %p300, %p301
      %s304 = sadd.s32 %s303, 1
      %p307 = scmp.eq.s32.totalorder %s75, 1
      %p308 = scmp.ne.s32.totalorder %s303, %s305
      %p309 = scmp.eq.s32.totalorder %s75, 0
      %p310 = por %p308, %p309
      %p311 = scmp.ne.s32.totalorder %s303, %s305
      %p312 = scmp.eq.s32.totalorder %s80, 1
      %p313 = por %p311, %p312
      %p314 = scmp.ne.s32.totalorder %s305, %s306
      %p315 = scmp.eq.s32.totalorder %s80, 0
      %p316 = por %p314, %p315
      %p317 = scmp.ne.s32.totalorder %s305, %s306
      %p318 = scmp.eq.s32.totalorder %s81, 1
      %p319 = por %p317, %p318
      %p321 = scmp.ne.s32.totalorder %s306, %s320
      %p322 = scmp.eq.s32.totalorder %s81, 0
      %p323 = por %p321, %p322
      %s325 = sadd.s32 %s324, 1
      %p328 = scmp.eq.s32.totalorder %s75, 1
      %p329 = scmp.ne.s32.totalorder %s324, %s326
      %p330 = scmp.eq.s32.totalorder %s75, 0
      %p331 = por %p329, %p330
      %p332 = scmp.ne.s32.totalorder %s324, %s326
      %p333 = scmp.eq.s32.totalorder %s80, 1
      %p334 = por %p332, %p333
      %p335 = scmp.ne.s32.totalorder %s326, %s327
      %p336 = scmp.eq.s32.totalorder %s80, 0
      %p337 = por %p335, %p336
      %p338 = scmp.ne.s32.totalorder %s326, %s327
      %p339 = scmp.eq.s32.totalorder %s81, 1
      %p340 = por %p338, %p339
      %p342 = scmp.ne.s32.totalorder %s327, %s341
      %p343 = scmp.eq.s32.totalorder %s81, 0
      %p344 = por %p342, %p343
      %s346 = sadd.s32 %s345, 1
      %p349 = scmp.eq.s32.totalorder %s75, 1
      %p350 = scmp.ne.s32.totalorder %s345, %s347
      %p351 = scmp.eq.s32.totalorder %s75, 0
      %p352 = por %p350, %p351
      %p353 = scmp.ne.s32.totalorder %s345, %s347
      %p354 = scmp.eq.s32.totalorder %s80, 1
      %p355 = por %p353, %p354
      %p356 = scmp.ne.s32.totalorder %s347, %s348
      %p357 = scmp.eq.s32.totalorder %s80, 0
      %p358 = por %p356, %p357
      %p359 = scmp.ne.s32.totalorder %s347, %s348
      %p360 = scmp.eq.s32.totalorder %s81, 1
      %p361 = por %p359, %p360
      %p363 = scmp.ne.s32.totalorder %s348, %s362
      %p364 = scmp.eq.s32.totalorder %s81, 0
      %p365 = por %p363, %p364
      %s367 = sadd.s32 %s366, 1
      %p370 = scmp.eq.s32.totalorder %s75, 1
      %p371 = scmp.ne.s32.totalorder %s366, %s368
      %p372 = scmp.eq.s32.totalorder %s75, 0
      %p373 = por %p371, %p372
      %p374 = scmp.ne.s32.totalorder %s366, %s368
      %p375 = scmp.eq.s32.totalorder %s80, 1
      %p376 = por %p374, %p375
      %p377 = scmp.ne.s32.totalorder %s368, %s369
      %p378 = scmp.eq.s32.totalorder %s80, 0
      %p379 = por %p377, %p378
      %p380 = scmp.ne.s32.totalorder %s368, %s369
      %p381 = scmp.eq.s32.totalorder %s81, 1
      %p382 = por %p380, %p381
      %p384 = scmp.ne.s32.totalorder %s369, %s383
      %p385 = scmp.eq.s32.totalorder %s81, 0
      %p386 = por %p384, %p385
      %s388 = sadd.s32 %s387, 1
      %p391 = scmp.eq.s32.totalorder %s75, 1
      %p392 = scmp.ne.s32.totalorder %s387, %s389
      %p393 = scmp.eq.s32.totalorder %s75, 0
      %p394 = por %p392, %p393
      %p395 = scmp.ne.s32.totalorder %s387, %s389
      %p396 = scmp.eq.s32.totalorder %s80, 1
      %p397 = por %p395, %p396
      %p398 = scmp.ne.s32.totalorder %s389, %s390
      %p399 = scmp.eq.s32.totalorder %s80, 0
      %p400 = por %p398, %p399
      %p401 = scmp.ne.s32.totalorder %s389, %s390
      %p402 = scmp.eq.s32.totalorder %s81, 1
      %p403 = por %p401, %p402
      %p405 = scmp.ne.s32.totalorder %s390, %s404
      %p406 = scmp.eq.s32.totalorder %s81, 0
      %p407 = por %p405, %p406
      %s409 = sadd.s32 %s408, 1
      %p412 = scmp.eq.s32.totalorder %s75, 1
      %p413 = scmp.ne.s32.totalorder %s408, %s410
      %p414 = scmp.eq.s32.totalorder %s75, 0
      %p415 = por %p413, %p414
      %p416 = scmp.ne.s32.totalorder %s408, %s410
      %p417 = scmp.eq.s32.totalorder %s80, 1
      %p418 = por %p416, %p417
      %p419 = scmp.ne.s32.totalorder %s410, %s411
      %p420 = scmp.eq.s32.totalorder %s80, 0
      %p421 = por %p419, %p420
      %p422 = scmp.ne.s32.totalorder %s410, %s411
      %p423 = scmp.eq.s32.totalorder %s81, 1
      %p424 = por %p422, %p423
      %p426 = scmp.ne.s32.totalorder %s411, %s425
      %p427 = scmp.eq.s32.totalorder %s81, 0
      %p428 = por %p426, %p427
      %s430 = sadd.s32 %s429, 1
      %p433 = scmp.eq.s32.totalorder %s75, 1
      %p434 = scmp.ne.s32.totalorder %s429, %s431
      %p435 = scmp.eq.s32.totalorder %s75, 0
      %p436 = por %p434, %p435
      %p437 = scmp.ne.s32.totalorder %s429, %s431
      %p438 = scmp.eq.s32.totalorder %s80, 1
      %p439 = por %p437, %p438
      %p440 = scmp.ne.s32.totalorder %s431, %s432
      %p441 = scmp.eq.s32.totalorder %s80, 0
      %p442 = por %p440, %p441
      %p443 = scmp.ne.s32.totalorder %s431, %s432
      %p444 = scmp.eq.s32.totalorder %s81, 1
      %p445 = por %p443, %p444
      %p447 = scmp.ne.s32.totalorder %s432, %s446
      %p448 = scmp.eq.s32.totalorder %s81, 0
      %p449 = por %p447, %p448
      %s451 = sadd.s32 %s450, 1
      %p454 = scmp.eq.s32.totalorder %s75, 1
      %p455 = scmp.ne.s32.totalorder %s450, %s452
      %p456 = scmp.eq.s32.totalorder %s75, 0
      %p457 = por %p455, %p456
      %p458 = scmp.ne.s32.totalorder %s450, %s452
      %p459 = scmp.eq.s32.totalorder %s80, 1
      %p460 = por %p458, %p459
      %p461 = scmp.ne.s32.totalorder %s452, %s453
      %p462 = scmp.eq.s32.totalorder %s80, 0
      %p463 = por %p461, %p462
      %p464 = scmp.ne.s32.totalorder %s452, %s453
      %p465 = scmp.eq.s32.totalorder %s81, 1
      %p466 = por %p464, %p465
      %p468 = scmp.ne.s32.totalorder %s453, %s467
      %p469 = scmp.eq.s32.totalorder %s81, 0
      %p470 = por %p468, %p469
      %s472 = sadd.s32 %s471, 1
      %p475 = scmp.eq.s32.totalorder %s75, 1
      %p476 = scmp.ne.s32.totalorder %s471, %s473
      %p477 = scmp.eq.s32.totalorder %s75, 0
      %p478 = por %p476, %p477
      %p479 = scmp.ne.s32.totalorder %s471, %s473
      %p480 = scmp.eq.s32.totalorder %s80, 1
      %p481 = por %p479, %p480
      %p482 = scmp.ne.s32.totalorder %s473, %s474
      %p483 = scmp.eq.s32.totalorder %s80, 0
      %p484 = por %p482, %p483
      %p485 = scmp.ne.s32.totalorder %s473, %s474
      %p486 = scmp.eq.s32.totalorder %s81, 1
      %p487 = por %p485, %p486
      %p489 = scmp.ne.s32.totalorder %s474, %s488
      %p490 = scmp.eq.s32.totalorder %s81, 0
      %p491 = por %p489, %p490
      %s493 = sadd.s32 %s492, 1
      %p496 = scmp.eq.s32.totalorder %s75, 1
      %p497 = scmp.ne.s32.totalorder %s492, %s494
      %p498 = scmp.eq.s32.totalorder %s75, 0
      %p499 = por %p497, %p498
      %p500 = scmp.ne.s32.totalorder %s492, %s494
      %p501 = scmp.eq.s32.totalorder %s80, 1
      %p502 = por %p500, %p501
      %p503 = scmp.ne.s32.totalorder %s494, %s495
      %p504 = scmp.eq.s32.totalorder %s80, 0
      %p505 = por %p503, %p504
      %p506 = scmp.ne.s32.totalorder %s494, %s495
      %p507 = scmp.eq.s32.totalorder %s81, 1
      %p508 = por %p506, %p507
      %p510 = scmp.ne.s32.totalorder %s495, %s509
      %p511 = scmp.eq.s32.totalorder %s81, 0
      %p512 = por %p510, %p511
      %s514 = sadd.s32 %s513, 1
      %p517 = scmp.eq.s32.totalorder %s75, 1
      %p518 = scmp.ne.s32.totalorder %s513, %s515
      %p519 = scmp.eq.s32.totalorder %s75, 0
      %p520 = por %p518, %p519
      %p521 = scmp.ne.s32.totalorder %s513, %s515
      %p522 = scmp.eq.s32.totalorder %s80, 1
      %p523 = por %p521, %p522
      %p524 = scmp.ne.s32.totalorder %s515, %s516
      %p525 = scmp.eq.s32.totalorder %s80, 0
      %p526 = por %p524, %p525
      %p527 = scmp.ne.s32.totalorder %s515, %s516
      %p528 = scmp.eq.s32.totalorder %s81, 1
      %p529 = por %p527, %p528
      %p531 = scmp.ne.s32.totalorder %s516, %s530
      %p532 = scmp.eq.s32.totalorder %s81, 0
      %p533 = por %p531, %p532
      %s535 = sadd.s32 %s534, 1
      %p538 = scmp.eq.s32.totalorder %s75, 1
      %p539 = scmp.ne.s32.totalorder %s534, %s536
      %p540 = scmp.eq.s32.totalorder %s75, 0
      %p541 = por %p539, %p540
      %p542 = scmp.ne.s32.totalorder %s534, %s536
      %p543 = scmp.eq.s32.totalorder %s80, 1
      %p544 = por %p542, %p543
      %p545 = scmp.ne.s32.totalorder %s536, %s537
      %p546 = scmp.eq.s32.totalorder %s80, 0
      %p547 = por %p545, %p546
      %p548 = scmp.ne.s32.totalorder %s536, %s537
      %p549 = scmp.eq.s32.totalorder %s81, 1
      %p550 = por %p548, %p549
      %p552 = scmp.ne.s32.totalorder %s537, %s551
      %p553 = scmp.eq.s32.totalorder %s81, 0
      %p554 = por %p552, %p553
      %s556 = sadd.s32 %s555, 1
      %p559 = scmp.eq.s32.totalorder %s75, 1
      %p560 = scmp.ne.s32.totalorder %s555, %s557
      %p561 = scmp.eq.s32.totalorder %s75, 0
      %p562 = por %p560, %p561
      %p563 = scmp.ne.s32.totalorder %s555, %s557
      %p564 = scmp.eq.s32.totalorder %s80, 1
      %p565 = por %p563, %p564
      %p566 = scmp.ne.s32.totalorder %s557, %s558
      %p567 = scmp.eq.s32.totalorder %s80, 0
      %p568 = por %p566, %p567
      %p569 = scmp.ne.s32.totalorder %s557, %s558
      %p570 = scmp.eq.s32.totalorder %s81, 1
      %p571 = por %p569, %p570
      %p573 = scmp.ne.s32.totalorder %s558, %s572
      %p574 = scmp.eq.s32.totalorder %s81, 0
      %p575 = por %p573, %p574
      %s577 = sadd.s32 %s576, 1
      %p580 = scmp.eq.s32.totalorder %s75, 1
      %p581 = scmp.ne.s32.totalorder %s576, %s578
      %p582 = scmp.eq.s32.totalorder %s75, 0
      %p583 = por %p581, %p582
      %p584 = scmp.ne.s32.totalorder %s576, %s578
      %p585 = scmp.eq.s32.totalorder %s80, 1
      %p586 = por %p584, %p585
      %p587 = scmp.ne.s32.totalorder %s578, %s579
      %p588 = scmp.eq.s32.totalorder %s80, 0
      %p589 = por %p587, %p588
      %p590 = scmp.ne.s32.totalorder %s578, %s579
      %p591 = scmp.eq.s32.totalorder %s81, 1
      %p592 = por %p590, %p591
      %p594 = scmp.ne.s32.totalorder %s579, %s593
      %p595 = scmp.eq.s32.totalorder %s81, 0
      %p596 = por %p594, %p595
      %s598 = sadd.s32 %s597, 1
      %p601 = scmp.eq.s32.totalorder %s75, 1
      %p602 = scmp.ne.s32.totalorder %s597, %s599
      %p603 = scmp.eq.s32.totalorder %s75, 0
      %p604 = por %p602, %p603
      %p605 = scmp.ne.s32.totalorder %s597, %s599
      %p606 = scmp.eq.s32.totalorder %s80, 1
      %p607 = por %p605, %p606
      %p608 = scmp.ne.s32.totalorder %s599, %s600
      %p609 = scmp.eq.s32.totalorder %s80, 0
      %p610 = por %p608, %p609
      %p611 = scmp.ne.s32.totalorder %s599, %s600
      %p612 = scmp.eq.s32.totalorder %s81, 1
      %p613 = por %p611, %p612
      %p615 = scmp.ne.s32.totalorder %s600, %s614
      %p616 = scmp.eq.s32.totalorder %s81, 0
      %p617 = por %p615, %p616
      %s619 = sadd.s32 %s618, 1
      %p622 = scmp.eq.s32.totalorder %s75, 1
      %p623 = scmp.ne.s32.totalorder %s618, %s620
      %p624 = scmp.eq.s32.totalorder %s75, 0
      %p625 = por %p623, %p624
      %p626 = scmp.ne.s32.totalorder %s618, %s620
      %p627 = scmp.eq.s32.totalorder %s80, 1
      %p628 = por %p626, %p627
      %p629 = scmp.ne.s32.totalorder %s620, %s621
      %p630 = scmp.eq.s32.totalorder %s80, 0
      %p631 = por %p629, %p630
      %p632 = scmp.ne.s32.totalorder %s620, %s621
      %p633 = scmp.eq.s32.totalorder %s81, 1
      %p634 = por %p632, %p633
      %p636 = scmp.ne.s32.totalorder %s621, %s635
      %p637 = scmp.eq.s32.totalorder %s81, 0
      %p638 = por %p636, %p637
      %s640 = sadd.s32 %s639, 1
      %p643 = scmp.eq.s32.totalorder %s75, 1
      %p644 = scmp.ne.s32.totalorder %s639, %s641
      %p645 = scmp.eq.s32.totalorder %s75, 0
      %p646 = por %p644, %p645
      %p647 = scmp.ne.s32.totalorder %s639, %s641
      %p648 = scmp.eq.s32.totalorder %s80, 1
      %p649 = por %p647, %p648
      %p650 = scmp.ne.s32.totalorder %s641, %s642
      %p651 = scmp.eq.s32.totalorder %s80, 0
      %p652 = por %p650, %p651
      %p653 = scmp.ne.s32.totalorder %s641, %s642
      %p654 = scmp.eq.s32.totalorder %s81, 1
      %p655 = por %p653, %p654
      %p657 = scmp.ne.s32.totalorder %s642, %s656
      %p658 = scmp.eq.s32.totalorder %s81, 0
      %p659 = por %p657, %p658
      %s661 = sadd.s32 %s660, 1
      %p664 = scmp.eq.s32.totalorder %s75, 1
      %p665 = scmp.ne.s32.totalorder %s660, %s662
      %p666 = scmp.eq.s32.totalorder %s75, 0
      %p667 = por %p665, %p666
      %p668 = scmp.ne.s32.totalorder %s660, %s662
      %p669 = scmp.eq.s32.totalorder %s80, 1
      %p670 = por %p668, %p669
      %p671 = scmp.ne.s32.totalorder %s662, %s663
      %p672 = scmp.eq.s32.totalorder %s80, 0
      %p673 = por %p671, %p672
      %p674 = scmp.ne.s32.totalorder %s662, %s663
      %p675 = scmp.eq.s32.totalorder %s81, 1
      %p676 = por %p674, %p675
      %p678 = scmp.ne.s32.totalorder %s663, %s677
      %p679 = scmp.eq.s32.totalorder %s81, 0
      %p680 = por %p678, %p679
      %s682 = sadd.s32 %s681, 1
      %p685 = scmp.eq.s32.totalorder %s75, 1
      %p686 = scmp.ne.s32.totalorder %s681, %s683
      %p687 = scmp.eq.s32.totalorder %s75, 0
      %p688 = por %p686, %p687
      %p689 = scmp.ne.s32.totalorder %s681, %s683
      %p690 = scmp.eq.s32.totalorder %s80, 1
      %p691 = por %p689, %p690
      %p692 = scmp.ne.s32.totalorder %s683, %s684
      %p693 = scmp.eq.s32.totalorder %s80, 0
      %p694 = por %p692, %p693
      %p695 = scmp.ne.s32.totalorder %s683, %s684
      %p696 = scmp.eq.s32.totalorder %s81, 1
      %p697 = por %p695, %p696
      %p699 = scmp.ne.s32.totalorder %s684, %s698
      %p700 = scmp.eq.s32.totalorder %s81, 0
      %p701 = por %p699, %p700
      %s703 = sadd.s32 %s702, 1
      %p706 = scmp.eq.s32.totalorder %s75, 1
      %p707 = scmp.ne.s32.totalorder %s702, %s704
      %p708 = scmp.eq.s32.totalorder %s75, 0
      %p709 = por %p707, %p708
      %p710 = scmp.ne.s32.totalorder %s702, %s704
      %p711 = scmp.eq.s32.totalorder %s80, 1
      %p712 = por %p710, %p711
      %p713 = scmp.ne.s32.totalorder %s704, %s705
      %p714 = scmp.eq.s32.totalorder %s80, 0
      %p715 = por %p713, %p714
      %p716 = scmp.ne.s32.totalorder %s704, %s705
      %p717 = scmp.eq.s32.totalorder %s81, 1
      %p718 = por %p716, %p717
      %p720 = scmp.ne.s32.totalorder %s705, %s719
      %p721 = scmp.eq.s32.totalorder %s81, 0
      %p722 = por %p720, %p721
      %s723 = ssub.s32 %s75, %s82
      %p724 = scmp.eq.s32.totalorder %s723, 0
      %s726 = sadd.s32 %s725, 1
      %s727 = scalar_select %p724, %s725, %s726
      %p730 = pneg %p724
      %p731 = scmp.eq.s32.totalorder %s75, 1
      %p732 = por %p730, %p731
      %p733 = scmp.ne.s32.totalorder %s725, %s728
      %p734 = scmp.eq.s32.totalorder %s75, 0
      %p735 = por %p733, %p734
      %p736 = scmp.ne.s32.totalorder %s725, %s728
      %p737 = scmp.eq.s32.totalorder %s80, 1
      %p738 = por %p736, %p737
      %p739 = scmp.ne.s32.totalorder %s728, %s729
      %p740 = scmp.eq.s32.totalorder %s80, 0
      %p741 = por %p739, %p740
      %p742 = scmp.ne.s32.totalorder %s728, %s729
      %p743 = scmp.eq.s32.totalorder %s81, 1
      %p744 = por %p742, %p743
      %p746 = scmp.ne.s32.totalorder %s729, %s745
      %p747 = scmp.eq.s32.totalorder %s81, 0
      %p748 = por %p746, %p747
      %p749 = scmp.le.s32.totalorder 1, %s75
      %p750 = scmp.lt.s32.totalorder %s75, 3
      %p751 = pnand %p749, %p750
      %p752 = pneg %p751
      // Predicated region
      $region9: #{roberta_wrapper_forward.1} parent=5 // pred_check
        _
      $region10: #{roberta_wrapper_forward.1} parent=5 // pred_check_branch
        %754 = sbr.rel (%p751) target = $region12
      $region11: #{roberta_wrapper_forward.1} parent=5 // pred_region
        %s755 = ssub.s32 %s75, 1
        // Predicated region
        $region13: #{roberta_wrapper_forward.1} parent=11 // pred_check
          %p756 = pneg %p148
        $region14: #{roberta_wrapper_forward.1} parent=11 // pred_check_branch
          %758 = sbr.rel (%p756) target = $region16
        $region15: #{roberta_wrapper_forward.1} parent=11 // pred_region
          _
        $region16: #{roberta_wrapper_forward.1} parent=11 // pred_fallthru
          _
        // Predicated region
        $region17: #{roberta_wrapper_forward.1} parent=11 // pred_check
          %p759 = pneg %p169
        $region18: #{roberta_wrapper_forward.1} parent=11 // pred_check_branch
          %761 = sbr.rel (%p759) target = $region20
        $region19: #{roberta_wrapper_forward.1} parent=11 // pred_region
          _
        $region20: #{roberta_wrapper_forward.1} parent=11 // pred_fallthru
          _
        // Predicated region
        $region21: #{roberta_wrapper_forward.1} parent=11 // pred_check
          %p762 = pneg %p190
        $region22: #{roberta_wrapper_forward.1} parent=11 // pred_check_branch
          %764 = sbr.rel (%p762) target = $region24
        $region23: #{roberta_wrapper_forward.1} parent=11 // pred_region
          _
        $region24: #{roberta_wrapper_forward.1} parent=11 // pred_fallthru
          _
        // Predicated region
        $region25: #{roberta_wrapper_forward.1} parent=11 // pred_check
          %p765 = pneg %p211
        $region26: #{roberta_wrapper_forward.1} parent=11 // pred_check_branch
          %767 = sbr.rel (%p765) target = $region28
        $region27: #{roberta_wrapper_forward.1} parent=11 // pred_region
          _
        $region28: #{roberta_wrapper_forward.1} parent=11 // pred_fallthru
          _
        // Predicated region
        $region29: #{roberta_wrapper_forward.1} parent=11 // pred_check
          %p768 = pneg %p232
        $region30: #{roberta_wrapper_forward.1} parent=11 // pred_check_branch
          %770 = sbr.rel (%p768) target = $region32
        $region31: #{roberta_wrapper_forward.1} parent=11 // pred_region
          %s772 = ssub.s32 2048, 2048
          %773 = vsyncadd [#allocation3], %s772
          %s774 = sshll.u32 [#allocation2], 4
          %s775 = int_to_ptr.vmem [resolvable:$true] %s774
          %780 = dma.hbm_to_vmem [thread:$0]  %s13, 2048, %s775, [#allocation3], 128, 128, 8
        $region32: #{roberta_wrapper_forward.1} parent=11 // pred_fallthru
          _
        // Predicated region
        $region33: #{roberta_wrapper_forward.1} parent=11 // pred_check
          %p781 = pneg %p253
        $region34: #{roberta_wrapper_forward.1} parent=11 // pred_check_branch
          %783 = sbr.rel (%p781) target = $region36
        $region35: #{roberta_wrapper_forward.1} parent=11 // pred_region
          _
        $region36: #{roberta_wrapper_forward.1} parent=11 // pred_fallthru
          _
        // Predicated region
        $region37: #{roberta_wrapper_forward.1} parent=11 // pred_check
          %p784 = pneg %p274
        $region38: #{roberta_wrapper_forward.1} parent=11 // pred_check_branch
          %786 = sbr.rel (%p784) target = $region40
        $region39: #{roberta_wrapper_forward.1} parent=11 // pred_region
          %s788 = ssub.s32 2048, 2048
          %789 = vsyncadd [#allocation6], %s788
          %s790 = sshll.u32 [#allocation5], 4
          %s791 = int_to_ptr.vmem [resolvable:$true] %s790
          %796 = dma.hbm_to_vmem [thread:$0]  %s17, 2048, %s791, [#allocation6], 128, 128, 8
        $region40: #{roberta_wrapper_forward.1} parent=11 // pred_fallthru
          _
        // Predicated region
        $region41: #{roberta_wrapper_forward.1} parent=11 // pred_check
          %p797 = pneg %p295
        $region42: #{roberta_wrapper_forward.1} parent=11 // pred_check_branch
          %799 = sbr.rel (%p797) target = $region44
        $region43: #{roberta_wrapper_forward.1} parent=11 // pred_region
          _
        $region44: #{roberta_wrapper_forward.1} parent=11 // pred_fallthru
          _
        // Predicated region
        $region45: #{roberta_wrapper_forward.1} parent=11 // pred_check
          %p800 = pneg %p316
        $region46: #{roberta_wrapper_forward.1} parent=11 // pred_check_branch
          %802 = sbr.rel (%p800) target = $region48
        $region47: #{roberta_wrapper_forward.1} parent=11 // pred_region
          %s804 = ssub.s32 2048, 2048
          %805 = vsyncadd [#allocation6], %s804
          %s806 = sshll.u32 [#allocation7], 4
          %s807 = int_to_ptr.vmem [resolvable:$true] %s806
          %812 = dma.hbm_to_vmem [thread:$0]  %s21, 2048, %s807, [#allocation6], 128, 128, 8
        $region48: #{roberta_wrapper_forward.1} parent=11 // pred_fallthru
          _
        // Predicated region
        $region49: #{roberta_wrapper_forward.1} parent=11 // pred_check
          %p813 = pneg %p337
        $region50: #{roberta_wrapper_forward.1} parent=11 // pred_check_branch
          %815 = sbr.rel (%p813) target = $region52
        $region51: #{roberta_wrapper_forward.1} parent=11 // pred_region
          _
        $region52: #{roberta_wrapper_forward.1} parent=11 // pred_fallthru
          _
        // Predicated region
        $region53: #{roberta_wrapper_forward.1} parent=11 // pred_check
          %p816 = pneg %p358
        $region54: #{roberta_wrapper_forward.1} parent=11 // pred_check_branch
          %818 = sbr.rel (%p816) target = $region56
        $region55: #{roberta_wrapper_forward.1} parent=11 // pred_region
          _
        $region56: #{roberta_wrapper_forward.1} parent=11 // pred_fallthru
          _
        // Predicated region
        $region57: #{roberta_wrapper_forward.1} parent=11 // pred_check
          %p819 = pneg %p379
        $region58: #{roberta_wrapper_forward.1} parent=11 // pred_check_branch
          %821 = sbr.rel (%p819) target = $region60
        $region59: #{roberta_wrapper_forward.1} parent=11 // pred_region
          _
        $region60: #{roberta_wrapper_forward.1} parent=11 // pred_fallthru
          _
        // Predicated region
        $region61: #{roberta_wrapper_forward.1} parent=11 // pred_check
          %p822 = pneg %p400
        $region62: #{roberta_wrapper_forward.1} parent=11 // pred_check_branch
          %824 = sbr.rel (%p822) target = $region64
        $region63: #{roberta_wrapper_forward.1} parent=11 // pred_region
          %s826 = ssub.s32 2048, 2048
          %827 = vsyncadd [#allocation9], %s826
          %s828 = sshll.u32 [#allocation8], 4
          %s829 = int_to_ptr.vmem [resolvable:$true] %s828
          %834 = dma.hbm_to_vmem [thread:$0]  %s29, 2048, %s829, [#allocation9], 128, 128, 8
        $region64: #{roberta_wrapper_forward.1} parent=11 // pred_fallthru
          _
        // Predicated region
        $region65: #{roberta_wrapper_forward.1} parent=11 // pred_check
          %p835 = pneg %p421
        $region66: #{roberta_wrapper_forward.1} parent=11 // pred_check_branch
          %837 = sbr.rel (%p835) target = $region68
        $region67: #{roberta_wrapper_forward.1} parent=11 // pred_region
          _
        $region68: #{roberta_wrapper_forward.1} parent=11 // pred_fallthru
          _
        // Predicated region
        $region69: #{roberta_wrapper_forward.1} parent=11 // pred_check
          %p838 = pneg %p442
        $region70: #{roberta_wrapper_forward.1} parent=11 // pred_check_branch
          %840 = sbr.rel (%p838) target = $region72
        $region71: #{roberta_wrapper_forward.1} parent=11 // pred_region
          %s842 = ssub.s32 2048, 2048
          %843 = vsyncadd [#allocation9], %s842
          %s844 = sshll.u32 [#allocation10], 4
          %s845 = int_to_ptr.vmem [resolvable:$true] %s844
          %850 = dma.hbm_to_vmem [thread:$0]  %s33, 2048, %s845, [#allocation9], 128, 128, 8
        $region72: #{roberta_wrapper_forward.1} parent=11 // pred_fallthru
          _
        // Predicated region
        $region73: #{roberta_wrapper_forward.1} parent=11 // pred_check
          %p851 = pneg %p463
        $region74: #{roberta_wrapper_forward.1} parent=11 // pred_check_branch
          %853 = sbr.rel (%p851) target = $region76
        $region75: #{roberta_wrapper_forward.1} parent=11 // pred_region
          _
        $region76: #{roberta_wrapper_forward.1} parent=11 // pred_fallthru
          _
        // Predicated region
        $region77: #{roberta_wrapper_forward.1} parent=11 // pred_check
          %p854 = pneg %p484
        $region78: #{roberta_wrapper_forward.1} parent=11 // pred_check_branch
          %856 = sbr.rel (%p854) target = $region80
        $region79: #{roberta_wrapper_forward.1} parent=11 // pred_region
          _
        $region80: #{roberta_wrapper_forward.1} parent=11 // pred_fallthru
          _
        // Predicated region
        $region81: #{roberta_wrapper_forward.1} parent=11 // pred_check
          %p857 = pneg %p505
        $region82: #{roberta_wrapper_forward.1} parent=11 // pred_check_branch
          %859 = sbr.rel (%p857) target = $region84
        $region83: #{roberta_wrapper_forward.1} parent=11 // pred_region
          _
        $region84: #{roberta_wrapper_forward.1} parent=11 // pred_fallthru
          _
        // Predicated region
        $region85: #{roberta_wrapper_forward.1} parent=11 // pred_check
          %p860 = pneg %p526
        $region86: #{roberta_wrapper_forward.1} parent=11 // pred_check_branch
          %862 = sbr.rel (%p860) target = $region88
        $region87: #{roberta_wrapper_forward.1} parent=11 // pred_region
          %s864 = ssub.s32 2048, 2048
          %865 = vsyncadd [#allocation12], %s864
          %s866 = sshll.u32 [#allocation11], 4
          %s867 = int_to_ptr.vmem [resolvable:$true] %s866
          %872 = dma.hbm_to_vmem [thread:$0]  %s41, 2048, %s867, [#allocation12], 128, 128, 8
        $region88: #{roberta_wrapper_forward.1} parent=11 // pred_fallthru
          _
        // Predicated region
        $region89: #{roberta_wrapper_forward.1} parent=11 // pred_check
          %p873 = pneg %p547
        $region90: #{roberta_wrapper_forward.1} parent=11 // pred_check_branch
          %875 = sbr.rel (%p873) target = $region92
        $region91: #{roberta_wrapper_forward.1} parent=11 // pred_region
          _
        $region92: #{roberta_wrapper_forward.1} parent=11 // pred_fallthru
          _
        // Predicated region
        $region93: #{roberta_wrapper_forward.1} parent=11 // pred_check
          %p876 = pneg %p568
        $region94: #{roberta_wrapper_forward.1} parent=11 // pred_check_branch
          %878 = sbr.rel (%p876) target = $region96
        $region95: #{roberta_wrapper_forward.1} parent=11 // pred_region
          _
        $region96: #{roberta_wrapper_forward.1} parent=11 // pred_fallthru
          _
        // Predicated region
        $region97: #{roberta_wrapper_forward.1} parent=11 // pred_check
          %p879 = pneg %p589
        $region98: #{roberta_wrapper_forward.1} parent=11 // pred_check_branch
          %881 = sbr.rel (%p879) target = $region100
        $region99: #{roberta_wrapper_forward.1} parent=11 // pred_region
          _
        $region100: #{roberta_wrapper_forward.1} parent=11 // pred_fallthru
          _
        // Predicated region
        $region101: #{roberta_wrapper_forward.1} parent=11 // pred_check
          %p882 = pneg %p610
        $region102: #{roberta_wrapper_forward.1} parent=11 // pred_check_branch
          %884 = sbr.rel (%p882) target = $region104
        $region103: #{roberta_wrapper_forward.1} parent=11 // pred_region
          %s886 = ssub.s32 2048, 2048
          %887 = vsyncadd [#allocation12], %s886
          %s888 = sshll.u32 [#allocation13], 4
          %s889 = int_to_ptr.vmem [resolvable:$true] %s888
          %894 = dma.hbm_to_vmem [thread:$0]  %s49, 2048, %s889, [#allocation12], 128, 128, 8
        $region104: #{roberta_wrapper_forward.1} parent=11 // pred_fallthru
          _
        // Predicated region
        $region105: #{roberta_wrapper_forward.1} parent=11 // pred_check
          %p895 = pneg %p631
        $region106: #{roberta_wrapper_forward.1} parent=11 // pred_check_branch
          %897 = sbr.rel (%p895) target = $region108
        $region107: #{roberta_wrapper_forward.1} parent=11 // pred_region
          _
        $region108: #{roberta_wrapper_forward.1} parent=11 // pred_fallthru
          _
        // Predicated region
        $region109: #{roberta_wrapper_forward.1} parent=11 // pred_check
          %p898 = pneg %p652
        $region110: #{roberta_wrapper_forward.1} parent=11 // pred_check_branch
          %900 = sbr.rel (%p898) target = $region112
        $region111: #{roberta_wrapper_forward.1} parent=11 // pred_region
          %s902 = ssub.s32 2048, 2048
          %903 = vsyncadd [#allocation15], %s902
          %s904 = sshll.u32 [#allocation14], 4
          %s905 = int_to_ptr.vmem [resolvable:$true] %s904
          %910 = dma.hbm_to_vmem [thread:$0]  %s53, 2048, %s905, [#allocation15], 128, 128, 8
        $region112: #{roberta_wrapper_forward.1} parent=11 // pred_fallthru
          _
        // Predicated region
        $region113: #{roberta_wrapper_forward.1} parent=11 // pred_check
          %p911 = pneg %p673
        $region114: #{roberta_wrapper_forward.1} parent=11 // pred_check_branch
          %913 = sbr.rel (%p911) target = $region116
        $region115: #{roberta_wrapper_forward.1} parent=11 // pred_region
          _
        $region116: #{roberta_wrapper_forward.1} parent=11 // pred_fallthru
          _
        // Predicated region
        $region117: #{roberta_wrapper_forward.1} parent=11 // pred_check
          %p914 = pneg %p694
        $region118: #{roberta_wrapper_forward.1} parent=11 // pred_check_branch
          %916 = sbr.rel (%p914) target = $region120
        $region119: #{roberta_wrapper_forward.1} parent=11 // pred_region
          %s918 = ssub.s32 2048, 2048
          %919 = vsyncadd [#allocation15], %s918
          %s920 = sshll.u32 [#allocation16], 4
          %s921 = int_to_ptr.vmem [resolvable:$true] %s920
          %926 = dma.hbm_to_vmem [thread:$0]  %s57, 2048, %s921, [#allocation15], 128, 128, 8
        $region120: #{roberta_wrapper_forward.1} parent=11 // pred_fallthru
          _
        // Predicated region
        $region121: #{roberta_wrapper_forward.1} parent=11 // pred_check
          %p927 = pneg %p715
        $region122: #{roberta_wrapper_forward.1} parent=11 // pred_check_branch
          %929 = sbr.rel (%p927) target = $region124
        $region123: #{roberta_wrapper_forward.1} parent=11 // pred_region
          _
        $region124: #{roberta_wrapper_forward.1} parent=11 // pred_fallthru
          _
      $region12: #{roberta_wrapper_forward.1} parent=5 // pred_fallthru
        _
      %p930 = scmp.lt.s32.totalorder %s75, 2
      // Predicated region
      $region125: #{roberta_wrapper_forward.1} parent=5 // pred_check
        %p931 = pneg %p930
      $region126: #{roberta_wrapper_forward.1} parent=5 // pred_check_branch
        %933 = sbr.rel (%p931) target = $region128
      $region127: #{roberta_wrapper_forward.1} parent=5 // pred_region
        // Predicated region
        $region129: #{roberta_wrapper_forward.1} parent=127 // pred_check
          %p934 = pneg %p95
        $region130: #{roberta_wrapper_forward.1} parent=127 // pred_check_branch
          %936 = sbr.rel (%p934) target = $region132
        $region131: #{roberta_wrapper_forward.1} parent=127 // pred_region
          %p937 = scmp.lt.s32.totalorder %s75, 1
          %s938 = scalar_select %p937, %s75, 1
          %s939 = smul.addr %s938, 8
          %s940 = scalar_lea.vmem %s1, %s939
        $region132: #{roberta_wrapper_forward.1} parent=127 // pred_fallthru
          _
        // Predicated region
        $region133: #{roberta_wrapper_forward.1} parent=127 // pred_check
          %p941 = pneg %p121
        $region134: #{roberta_wrapper_forward.1} parent=127 // pred_check_branch
          %943 = sbr.rel (%p941) target = $region136
        $region135: #{roberta_wrapper_forward.1} parent=127 // pred_region
          %p944 = scmp.lt.s32.totalorder %s75, 1
          %s945 = scalar_select %p944, %s75, 1
          %s946 = scalar_lea.vmem %s3, %s945
        $region136: #{roberta_wrapper_forward.1} parent=127 // pred_fallthru
          _
      $region128: #{roberta_wrapper_forward.1} parent=5 // pred_fallthru
        _
      %p947 = scmp.le.s32.totalorder 1, %s75
      %p948 = scmp.lt.s32.totalorder %s75, 3
      %p949 = pnand %p947, %p948
      %p950 = pneg %p949
      // Predicated region
      $region137: #{roberta_wrapper_forward.1} parent=5 // pred_check
        _
      $region138: #{roberta_wrapper_forward.1} parent=5 // pred_check_branch
        %952 = sbr.rel (%p949) target = $region140
      $region139: #{roberta_wrapper_forward.1} parent=5 // pred_region
        %s953 = ssub.s32 %s75, 1
        // Predicated region
        $region141: #{roberta_wrapper_forward.1} parent=139 // pred_check
          %p954 = pneg %p232
        $region142: #{roberta_wrapper_forward.1} parent=139 // pred_check_branch
          %956 = sbr.rel (%p954) target = $region144
        $region143: #{roberta_wrapper_forward.1} parent=139 // pred_region
          %957 = dma.done [#allocation3], 2048
        $region144: #{roberta_wrapper_forward.1} parent=139 // pred_fallthru
          _
        // Predicated region
        $region145: #{roberta_wrapper_forward.1} parent=139 // pred_check
          %p958 = pneg %p274
        $region146: #{roberta_wrapper_forward.1} parent=139 // pred_check_branch
          %960 = sbr.rel (%p958) target = $region148
        $region147: #{roberta_wrapper_forward.1} parent=139 // pred_region
          %961 = dma.done [#allocation6], 2048
        $region148: #{roberta_wrapper_forward.1} parent=139 // pred_fallthru
          _
        // Predicated region
        $region149: #{roberta_wrapper_forward.1} parent=139 // pred_check
          %p962 = pneg %p316
        $region150: #{roberta_wrapper_forward.1} parent=139 // pred_check_branch
          %964 = sbr.rel (%p962) target = $region152
        $region151: #{roberta_wrapper_forward.1} parent=139 // pred_region
          %965 = dma.done [#allocation6], 2048
        $region152: #{roberta_wrapper_forward.1} parent=139 // pred_fallthru
          _
        // Predicated region
        $region153: #{roberta_wrapper_forward.1} parent=139 // pred_check
          %p966 = pneg %p400
        $region154: #{roberta_wrapper_forward.1} parent=139 // pred_check_branch
          %968 = sbr.rel (%p966) target = $region156
        $region155: #{roberta_wrapper_forward.1} parent=139 // pred_region
          %969 = dma.done [#allocation9], 2048
        $region156: #{roberta_wrapper_forward.1} parent=139 // pred_fallthru
          _
        // Predicated region
        $region157: #{roberta_wrapper_forward.1} parent=139 // pred_check
          %p970 = pneg %p442
        $region158: #{roberta_wrapper_forward.1} parent=139 // pred_check_branch
          %972 = sbr.rel (%p970) target = $region160
        $region159: #{roberta_wrapper_forward.1} parent=139 // pred_region
          %973 = dma.done [#allocation9], 2048
        $region160: #{roberta_wrapper_forward.1} parent=139 // pred_fallthru
          _
        // Predicated region
        $region161: #{roberta_wrapper_forward.1} parent=139 // pred_check
          %p974 = pneg %p526
        $region162: #{roberta_wrapper_forward.1} parent=139 // pred_check_branch
          %976 = sbr.rel (%p974) target = $region164
        $region163: #{roberta_wrapper_forward.1} parent=139 // pred_region
          %977 = dma.done [#allocation12], 2048
        $region164: #{roberta_wrapper_forward.1} parent=139 // pred_fallthru
          _
        // Predicated region
        $region165: #{roberta_wrapper_forward.1} parent=139 // pred_check
          %p978 = pneg %p610
        $region166: #{roberta_wrapper_forward.1} parent=139 // pred_check_branch
          %980 = sbr.rel (%p978) target = $region168
        $region167: #{roberta_wrapper_forward.1} parent=139 // pred_region
          %981 = dma.done [#allocation12], 2048
        $region168: #{roberta_wrapper_forward.1} parent=139 // pred_fallthru
          _
        // Predicated region
        $region169: #{roberta_wrapper_forward.1} parent=139 // pred_check
          %p982 = pneg %p652
        $region170: #{roberta_wrapper_forward.1} parent=139 // pred_check_branch
          %984 = sbr.rel (%p982) target = $region172
        $region171: #{roberta_wrapper_forward.1} parent=139 // pred_region
          %985 = dma.done [#allocation15], 2048
        $region172: #{roberta_wrapper_forward.1} parent=139 // pred_fallthru
          _
        // Predicated region
        $region173: #{roberta_wrapper_forward.1} parent=139 // pred_check
          %p986 = pneg %p694
        $region174: #{roberta_wrapper_forward.1} parent=139 // pred_check_branch
          %988 = sbr.rel (%p986) target = $region176
        $region175: #{roberta_wrapper_forward.1} parent=139 // pred_region
          %989 = dma.done [#allocation15], 2048
        $region176: #{roberta_wrapper_forward.1} parent=139 // pred_fallthru
          _
        %p990 = scmp.lt.s32.totalorder %s80, 1
        %s991 = scalar_select %p990, %s80, 1
        %s992 = smul.addr %s991, 8
        %s993 = scalar_lea.vmem %s1, %s992
        %p994 = pneg %p101
        %p995 = pneg %p98
        %p996 = scmp.lt.s32.totalorder %s80, 1
        %s997 = scalar_select %p996, %s80, 1
        %s998 = scalar_lea.vmem %s3, %s997
        %p999 = pneg %p127
        %p1000 = pneg %p124
        %p1001 = pneg %p148
        %p1002 = pneg %p145
        %p1003 = pneg %p169
        %p1004 = pneg %p166
        %p1005 = pneg %p190
        %p1006 = pneg %p187
        %p1007 = pneg %p211
        %p1008 = pneg %p208
        %p1009 = pneg %p232
        %p1010 = pneg %p229
        %p1011 = pneg %p253
        %p1012 = pneg %p250
        %p1013 = pneg %p274
        %p1014 = pneg %p271
        %p1015 = pneg %p295
        %p1016 = pneg %p292
        %p1017 = pneg %p316
        %p1018 = pneg %p313
        %p1019 = pneg %p337
        %p1020 = pneg %p334
        %p1021 = pneg %p358
        %p1022 = pneg %p355
        %p1023 = pneg %p379
        %p1024 = pneg %p376
        %p1025 = pneg %p400
        %p1026 = pneg %p397
        %p1027 = pneg %p421
        %p1028 = pneg %p418
        %p1029 = pneg %p442
        %p1030 = pneg %p439
        %p1031 = pneg %p463
        %p1032 = pneg %p460
        %p1033 = pneg %p484
        %p1034 = pneg %p481
        %p1035 = pneg %p505
        %p1036 = pneg %p502
        %p1037 = pneg %p526
        %p1038 = pneg %p523
        %p1039 = pneg %p547
        %p1040 = pneg %p544
        %p1041 = pneg %p568
        %p1042 = pneg %p565
        %p1043 = pneg %p589
        %p1044 = pneg %p586
        %p1045 = pneg %p610
        %p1046 = pneg %p607
        %p1047 = pneg %p631
        %p1048 = pneg %p628
        %p1049 = pneg %p652
        %p1050 = pneg %p649
        %p1051 = pneg %p673
        %p1052 = pneg %p670
        %p1053 = pneg %p694
        %p1054 = pneg %p691
        %p1055 = pneg %p715
        %p1056 = pneg %p712
        %p1057 = pneg %p741
        %p1058 = pneg %p738
        %s1059 = sand.u32 %s728, 1
        %s1060 = scalar_lea.sflag [#allocation4], %s1059
        %s1061 = sand.u32 %s728, 1
        %s1062 = scalar_lea.vmem [#allocation17], %s1061
        %p1063 = scmp.lt.s32.totalorder %s80, 1
        %s1064 = scalar_select %p1063, %s80, 1
        %s1065 = smul.addr %s1064, 8
        %s1066 = scalar_lea.vmem %s1, %s1065
        %p1067 = scmp.lt.s32.totalorder %s80, 1
        %s1068 = scalar_select %p1067, %s80, 1
        %s1069 = scalar_lea.vmem %s3, %s1068
        %v1070 = vld [vmem:[%s1066] sm:$0xff]
        %v1071 = vld [vmem:[%s5] sm:$0x1]
        %v1072 = vld [vmem:[%s7] sm:$0x1]
        %1073 = vadd.xlane.f32.xlu0 %v1070
        %v1074 = vpop.xlane.xlu0 %1073
        %v1075 = vmul.f32 %v1070, %v1070
        %1076 = vadd.xlane.f32.xlu0 %v1075
        %v1077 = vpop.xlane.xlu0 %1076
        %v1078 = vmul.f32 %v1074, 0.03125
        %v1079 = vmul.f32 %v1077, 0.03125
        %v1080 = vmul.f32 %v1078, %v1078
        %v1081 = vsub.f32 %v1079, %v1080
        %v1082 = vsub.f32 %v1070, %v1078
        %v1083 = vadd.f32 %v1081, 1e-05
        %v1084 = vrsqrt.pop %v1083
        %v1085 = vmul.f32 %v1082, %v1084
        %v1087 = vlaneseq
        %v1088 = vshrl.u32 %v1087, 7
        %v1089 = vsub.s32 0, %v1088
        %v1090 = vrot.slane %v1071, %v1089
        %v1092 = vmul.f32 %v1085, %v1090
        %v1094 = vlaneseq
        %v1095 = vshrl.u32 %v1094, 7
        %v1096 = vsub.s32 0, %v1095
        %v1097 = vrot.slane %v1072, %v1096
        %v1099 = vadd.f32 %v1092, %v1097
        %v1100 = vld [vmem:[%s9] sm:$0xff]
        %v1101 = vld [vmem:[%s9 + $0x8] sm:$0xff]
        %v1102 = vld [vmem:[%s9 + $0x10] sm:$0xff]
        %v1103 = vld [vmem:[%s9 + $0x18] sm:$0xff]
        %v1104 = vld [vmem:[%s9 + $0x20] sm:$0xff]
        %v1105 = vld [vmem:[%s9 + $0x28] sm:$0xff]
        %v1106 = vld [vmem:[%s9 + $0x30] sm:$0xff]
        %v1107 = vld [vmem:[%s9 + $0x38] sm:$0xff]
        %v1108 = vld [vmem:[%s9 + $0x40] sm:$0xff]
        %v1109 = vld [vmem:[%s9 + $0x48] sm:$0xff]
        %v1110 = vld [vmem:[%s9 + $0x50] sm:$0xff]
        %v1111 = vld [vmem:[%s9 + $0x58] sm:$0xff]
        %v1112 = vld [vmem:[%s9 + $0x60] sm:$0xff]
        %v1113 = vld [vmem:[%s9 + $0x68] sm:$0xff]
        %v1114 = vld [vmem:[%s9 + $0x70] sm:$0xff]
        %v1115 = vld [vmem:[%s9 + $0x78] sm:$0xff]
        %v1116 = vld [vmem:[%s11] sm:$0x1]
        %v1118 = vlaneseq
        %v1119 = vshrl.u32 %v1118, 7
        %v1120 = vsub.s32 0, %v1119
        %v1121 = vrot.slane %v1116, %v1120
        %1123 = vmatprep.subr.mxu0 0.0
        %1124 = vmatpush1.msra.mxu0 %v1100
        %1125 = vmatprep.subr.mxu0 0.0
        %1126 = vmatpush1.msra.mxu0 %v1101
        %1127 = vmatprep.subr.mxu0 0.0
        %1128 = vmatpush1.msra.mxu0 %v1102
        %1129 = vmatprep.subr.mxu0 0.0
        %1130 = vmatpush1.msra.mxu0 %v1103
        %1131 = vmatprep.subr.mxu0 0.0
        %1132 = vmatpush1.msra.mxu0 %v1104
        %1133 = vmatprep.subr.mxu0 0.0
        %1134 = vmatpush1.msra.mxu0 %v1105
        %1135 = vmatprep.subr.mxu0 0.0
        %1136 = vmatpush1.msra.mxu0 %v1106
        %1137 = vmatprep.subr.mxu0 0.0
        %1138 = vmatpush1.msra.mxu0 %v1107
        %1139 = vmatprep.subr.mxu0 0.0
        %1140 = vmatpush1.msra.mxu0 %v1108
        %1141 = vmatprep.subr.mxu0 0.0
        %1142 = vmatpush1.msra.mxu0 %v1109
        %1143 = vmatprep.subr.mxu0 0.0
        %1144 = vmatpush1.msra.mxu0 %v1110
        %1145 = vmatprep.subr.mxu0 0.0
        %1146 = vmatpush1.msra.mxu0 %v1111
        %1147 = vmatprep.subr.mxu0 0.0
        %1148 = vmatpush1.msra.mxu0 %v1112
        %1149 = vmatprep.subr.mxu0 0.0
        %1150 = vmatpush1.msra.mxu0 %v1113
        %1151 = vmatprep.subr.mxu0 0.0
        %1152 = vmatpush1.msra.mxu0 %v1114
        %1153 = vmatprep.subr.mxu0 0.0
        %1154 = vmatpush1.msra.mxu0 %v1115
        %1155 = vmatprep.subr.mxu0 0.0
        %1156 = vmatpush1.msra.mxu0 0.0
        %1157 = vmatprep.subr.mxu0 0.0
        %1158 = vmatpush1.msra.mxu0 0.0
        %1159 = vmatprep.subr.mxu0 0.0
        %1160 = vmatpush1.msra.mxu0 0.0
        %1161 = vmatprep.subr.mxu0 0.0
        %1162 = vmatpush1.msra.mxu0 0.0
        %1163 = vmatprep.subr.mxu0 0.0
        %1164 = vmatpush1.msra.mxu0 0.0
        %1165 = vmatprep.subr.mxu0 0.0
        %1166 = vmatpush1.msra.mxu0 0.0
        %1167 = vmatprep.subr.mxu0 0.0
        %1168 = vmatpush1.msra.mxu0 0.0
        %1169 = vmatprep.subr.mxu0 0.0
        %1170 = vmatpush1.msra.mxu0 0.0
        %1171 = vmatprep.subr.mxu0 0.0
        %1172 = vmatpush1.msra.mxu0 0.0
        %1173 = vmatprep.subr.mxu0 0.0
        %1174 = vmatpush1.msra.mxu0 0.0
        %1175 = vmatprep.subr.mxu0 0.0
        %1176 = vmatpush1.msra.mxu0 0.0
        %1177 = vmatprep.subr.mxu0 0.0
        %1178 = vmatpush1.msra.mxu0 0.0
        %1179 = vmatprep.subr.mxu0 0.0
        %1180 = vmatpush1.msra.mxu0 0.0
        %1181 = vmatprep.subr.mxu0 0.0
        %1182 = vmatpush1.msra.mxu0 0.0
        %1183 = vmatprep.subr.mxu0 0.0
        %1184 = vmatpush1.msra.mxu0 0.0
        %1185 = vmatprep.subr.mxu0 0.0
        %1186 = vmatpush1.msra.mxu0 0.0
        %1187 = vmatprep.mubr.f32.mxu0 0.0
        %1188 = vmatmul.mubr.f32.gmra.mrb[0].mxu0 %v1099
        %v1189 = vpop.f32.mrb[0].mxu0
        %v1190 = vadd.f32 %v1121, %v1189
        %v1191 = vpop.f32.mrb[0].mxu0
        %1192 = vdwg.mxu0
        %v1193 = vmul.f32 %v1190, 0.17677669
        %v1194 = vld [vmem:[#allocation2] sm:$0xff]
        %v1195 = vld [vmem:[#allocation2 + $0x8] sm:$0xff]
        %v1196 = vld [vmem:[#allocation2 + $0x10] sm:$0xff]
        %v1197 = vld [vmem:[#allocation2 + $0x18] sm:$0xff]
        %v1198 = vld [vmem:[#allocation2 + $0x20] sm:$0xff]
        %v1199 = vld [vmem:[#allocation2 + $0x28] sm:$0xff]
        %v1200 = vld [vmem:[#allocation2 + $0x30] sm:$0xff]
        %v1201 = vld [vmem:[#allocation2 + $0x38] sm:$0xff]
        %v1202 = vld [vmem:[#allocation2 + $0x40] sm:$0xff]
        %v1203 = vld [vmem:[#allocation2 + $0x48] sm:$0xff]
        %v1204 = vld [vmem:[#allocation2 + $0x50] sm:$0xff]
        %v1205 = vld [vmem:[#allocation2 + $0x58] sm:$0xff]
        %v1206 = vld [vmem:[#allocation2 + $0x60] sm:$0xff]
        %v1207 = vld [vmem:[#allocation2 + $0x68] sm:$0xff]
        %v1208 = vld [vmem:[#allocation2 + $0x70] sm:$0xff]
        %v1209 = vld [vmem:[#allocation2 + $0x78] sm:$0xff]
        %v1210 = vld [vmem:[%s15] sm:$0x1]
        %v1212 = vlaneseq
        %v1213 = vshrl.u32 %v1212, 7
        %v1214 = vsub.s32 0, %v1213
        %v1215 = vrot.slane %v1210, %v1214
        %1217 = vmatprep.subr.mxu0 0.0
        %1218 = vmatpush1.msra.mxu0 %v1194
        %1219 = vmatprep.subr.mxu0 0.0
        %1220 = vmatpush1.msra.mxu0 %v1195
        %1221 = vmatprep.subr.mxu0 0.0
        %1222 = vmatpush1.msra.mxu0 %v1196
        %1223 = vmatprep.subr.mxu0 0.0
        %1224 = vmatpush1.msra.mxu0 %v1197
        %1225 = vmatprep.subr.mxu0 0.0
        %1226 = vmatpush1.msra.mxu0 %v1198
        %1227 = vmatprep.subr.mxu0 0.0
        %1228 = vmatpush1.msra.mxu0 %v1199
        %1229 = vmatprep.subr.mxu0 0.0
        %1230 = vmatpush1.msra.mxu0 %v1200
        %1231 = vmatprep.subr.mxu0 0.0
        %1232 = vmatpush1.msra.mxu0 %v1201
        %1233 = vmatprep.subr.mxu0 0.0
        %1234 = vmatpush1.msra.mxu0 %v1202
        %1235 = vmatprep.subr.mxu0 0.0
        %1236 = vmatpush1.msra.mxu0 %v1203
        %1237 = vmatprep.subr.mxu0 0.0
        %1238 = vmatpush1.msra.mxu0 %v1204
        %1239 = vmatprep.subr.mxu0 0.0
        %1240 = vmatpush1.msra.mxu0 %v1205
        %1241 = vmatprep.subr.mxu0 0.0
        %1242 = vmatpush1.msra.mxu0 %v1206
        %1243 = vmatprep.subr.mxu0 0.0
        %1244 = vmatpush1.msra.mxu0 %v1207
        %1245 = vmatprep.subr.mxu0 0.0
        %1246 = vmatpush1.msra.mxu0 %v1208
        %1247 = vmatprep.subr.mxu0 0.0
        %1248 = vmatpush1.msra.mxu0 %v1209
        %1249 = vmatprep.subr.mxu0 0.0
        %1250 = vmatpush1.msra.mxu0 0.0
        %1251 = vmatprep.subr.mxu0 0.0
        %1252 = vmatpush1.msra.mxu0 0.0
        %1253 = vmatprep.subr.mxu0 0.0
        %1254 = vmatpush1.msra.mxu0 0.0
        %1255 = vmatprep.subr.mxu0 0.0
        %1256 = vmatpush1.msra.mxu0 0.0
        %1257 = vmatprep.subr.mxu0 0.0
        %1258 = vmatpush1.msra.mxu0 0.0
        %1259 = vmatprep.subr.mxu0 0.0
        %1260 = vmatpush1.msra.mxu0 0.0
        %1261 = vmatprep.subr.mxu0 0.0
        %1262 = vmatpush1.msra.mxu0 0.0
        %1263 = vmatprep.subr.mxu0 0.0
        %1264 = vmatpush1.msra.mxu0 0.0
        %1265 = vmatprep.subr.mxu0 0.0
        %1266 = vmatpush1.msra.mxu0 0.0
        %1267 = vmatprep.subr.mxu0 0.0
        %1268 = vmatpush1.msra.mxu0 0.0
        %1269 = vmatprep.subr.mxu0 0.0
        %1270 = vmatpush1.msra.mxu0 0.0
        %1271 = vmatprep.subr.mxu0 0.0
        %1272 = vmatpush1.msra.mxu0 0.0
        %1273 = vmatprep.subr.mxu0 0.0
        %1274 = vmatpush1.msra.mxu0 0.0
        %1275 = vmatprep.subr.mxu0 0.0
        %1276 = vmatpush1.msra.mxu0 0.0
        %1277 = vmatprep.subr.mxu0 0.0
        %1278 = vmatpush1.msra.mxu0 0.0
        %1279 = vmatprep.subr.mxu0 0.0
        %1280 = vmatpush1.msra.mxu0 0.0
        %1281 = vmatprep.mubr.f32.mxu0 0.0
        %1282 = vmatmul.mubr.f32.gmra.mrb[0].mxu0 %v1099
        %v1283 = vpop.f32.mrb[0].mxu0
        %v1284 = vadd.f32 %v1215, %v1283
        %v1285 = vpop.f32.mrb[0].mxu0
        %1286 = vdwg.mxu0
        %v1287 = vld [vmem:[#allocation5] sm:$0xff]
        %v1288 = vld [vmem:[#allocation5 + $0x8] sm:$0xff]
        %v1289 = vld [vmem:[#allocation5 + $0x10] sm:$0xff]
        %v1290 = vld [vmem:[#allocation5 + $0x18] sm:$0xff]
        %v1291 = vld [vmem:[#allocation5 + $0x20] sm:$0xff]
        %v1292 = vld [vmem:[#allocation5 + $0x28] sm:$0xff]
        %v1293 = vld [vmem:[#allocation5 + $0x30] sm:$0xff]
        %v1294 = vld [vmem:[#allocation5 + $0x38] sm:$0xff]
        %v1295 = vld [vmem:[#allocation5 + $0x40] sm:$0xff]
        %v1296 = vld [vmem:[#allocation5 + $0x48] sm:$0xff]
        %v1297 = vld [vmem:[#allocation5 + $0x50] sm:$0xff]
        %v1298 = vld [vmem:[#allocation5 + $0x58] sm:$0xff]
        %v1299 = vld [vmem:[#allocation5 + $0x60] sm:$0xff]
        %v1300 = vld [vmem:[#allocation5 + $0x68] sm:$0xff]
        %v1301 = vld [vmem:[#allocation5 + $0x70] sm:$0xff]
        %v1302 = vld [vmem:[#allocation5 + $0x78] sm:$0xff]
        %v1303 = vld [vmem:[%s19] sm:$0x1]
        %v1305 = vlaneseq
        %v1306 = vshrl.u32 %v1305, 7
        %v1307 = vsub.s32 0, %v1306
        %v1308 = vrot.slane %v1303, %v1307
        %1310 = vmatprep.subr.mxu0 0.0
        %1311 = vmatpush1.msra.mxu0 %v1287
        %1312 = vmatprep.subr.mxu0 0.0
        %1313 = vmatpush1.msra.mxu0 %v1288
        %1314 = vmatprep.subr.mxu0 0.0
        %1315 = vmatpush1.msra.mxu0 %v1289
        %1316 = vmatprep.subr.mxu0 0.0
        %1317 = vmatpush1.msra.mxu0 %v1290
        %1318 = vmatprep.subr.mxu0 0.0
        %1319 = vmatpush1.msra.mxu0 %v1291
        %1320 = vmatprep.subr.mxu0 0.0
        %1321 = vmatpush1.msra.mxu0 %v1292
        %1322 = vmatprep.subr.mxu0 0.0
        %1323 = vmatpush1.msra.mxu0 %v1293
        %1324 = vmatprep.subr.mxu0 0.0
        %1325 = vmatpush1.msra.mxu0 %v1294
        %1326 = vmatprep.subr.mxu0 0.0
        %1327 = vmatpush1.msra.mxu0 %v1295
        %1328 = vmatprep.subr.mxu0 0.0
        %1329 = vmatpush1.msra.mxu0 %v1296
        %1330 = vmatprep.subr.mxu0 0.0
        %1331 = vmatpush1.msra.mxu0 %v1297
        %1332 = vmatprep.subr.mxu0 0.0
        %1333 = vmatpush1.msra.mxu0 %v1298
        %1334 = vmatprep.subr.mxu0 0.0
        %1335 = vmatpush1.msra.mxu0 %v1299
        %1336 = vmatprep.subr.mxu0 0.0
        %1337 = vmatpush1.msra.mxu0 %v1300
        %1338 = vmatprep.subr.mxu0 0.0
        %1339 = vmatpush1.msra.mxu0 %v1301
        %1340 = vmatprep.subr.mxu0 0.0
        %1341 = vmatpush1.msra.mxu0 %v1302
        %1342 = vmatprep.subr.mxu0 0.0
        %1343 = vmatpush1.msra.mxu0 0.0
        %1344 = vmatprep.subr.mxu0 0.0
        %1345 = vmatpush1.msra.mxu0 0.0
        %1346 = vmatprep.subr.mxu0 0.0
        %1347 = vmatpush1.msra.mxu0 0.0
        %1348 = vmatprep.subr.mxu0 0.0
        %1349 = vmatpush1.msra.mxu0 0.0
        %1350 = vmatprep.subr.mxu0 0.0
        %1351 = vmatpush1.msra.mxu0 0.0
        %1352 = vmatprep.subr.mxu0 0.0
        %1353 = vmatpush1.msra.mxu0 0.0
        %1354 = vmatprep.subr.mxu0 0.0
        %1355 = vmatpush1.msra.mxu0 0.0
        %1356 = vmatprep.subr.mxu0 0.0
        %1357 = vmatpush1.msra.mxu0 0.0
        %1358 = vmatprep.subr.mxu0 0.0
        %1359 = vmatpush1.msra.mxu0 0.0
        %1360 = vmatprep.subr.mxu0 0.0
        %1361 = vmatpush1.msra.mxu0 0.0
        %1362 = vmatprep.subr.mxu0 0.0
        %1363 = vmatpush1.msra.mxu0 0.0
        %1364 = vmatprep.subr.mxu0 0.0
        %1365 = vmatpush1.msra.mxu0 0.0
        %1366 = vmatprep.subr.mxu0 0.0
        %1367 = vmatpush1.msra.mxu0 0.0
        %1368 = vmatprep.subr.mxu0 0.0
        %1369 = vmatpush1.msra.mxu0 0.0
        %1370 = vmatprep.subr.mxu0 0.0
        %1371 = vmatpush1.msra.mxu0 0.0
        %1372 = vmatprep.subr.mxu0 0.0
        %1373 = vmatpush1.msra.mxu0 0.0
        %1374 = vmatprep.mubr.f32.mxu0 0.0
        %1375 = vmatmul.mubr.f32.gmra.mrb[0].mxu0 %v1099
        %v1376 = vpop.f32.mrb[0].mxu0
        %v1377 = vadd.f32 %v1308, %v1376
        %v1378 = vpop.f32.mrb[0].mxu0
        %1379 = vdwg.mxu0
        %v1380 = vld [vmem:[%s1069] sm:$0x1]
        %v1381 = vsub.f32 1.0, %v1380
        %v1382 = vmul.f32 %v1381, -1e+09
        %v1384 = vlaneseq
        %v1385 = vshrl.u32 %v1384, 7
        %v1386 = vsub.s32 0, %v1385
        %v1387 = vrot.slane %v1382, %v1386
        %1389 = vmatprep.subr.mxu0 0.0
        %1390 = vmatpush1.xpose.msra.mxu0 %v1284
        %1391 = vmatprep.subr.mxu0 0.0
        %1392 = vmatpush1.xpose.msra.mxu0 0.0
        %1393 = vmatprep.subr.mxu0 0.0
        %1394 = vmatpush1.xpose.msra.mxu0 0.0
        %1395 = vmatprep.subr.mxu0 0.0
        %1396 = vmatpush1.xpose.msra.mxu0 0.0
        %1397 = vmatprep.subr.mxu0 0.0
        %1398 = vmatpush1.xpose.msra.mxu0 0.0
        %1399 = vmatprep.subr.mxu0 0.0
        %1400 = vmatpush1.xpose.msra.mxu0 0.0
        %1401 = vmatprep.subr.mxu0 0.0
        %1402 = vmatpush1.xpose.msra.mxu0 0.0
        %1403 = vmatprep.subr.mxu0 0.0
        %1404 = vmatpush1.xpose.msra.mxu0 0.0
        %1405 = vmatprep.subr.mxu0 0.0
        %1406 = vmatpush1.xpose.msra.mxu0 0.0
        %1407 = vmatprep.subr.mxu0 0.0
        %1408 = vmatpush1.xpose.msra.mxu0 0.0
        %1409 = vmatprep.subr.mxu0 0.0
        %1410 = vmatpush1.xpose.msra.mxu0 0.0
        %1411 = vmatprep.subr.mxu0 0.0
        %1412 = vmatpush1.xpose.msra.mxu0 0.0
        %1413 = vmatprep.subr.mxu0 0.0
        %1414 = vmatpush1.xpose.msra.mxu0 0.0
        %1415 = vmatprep.subr.mxu0 0.0
        %1416 = vmatpush1.xpose.msra.mxu0 0.0
        %1417 = vmatprep.subr.mxu0 0.0
        %1418 = vmatpush1.xpose.msra.mxu0 0.0
        %1419 = vmatprep.subr.mxu0 0.0
        %1420 = vmatpush1.xpose.msra.mxu0 0.0
        %1421 = vmatprep.subr.mxu0 0.0
        %1422 = vmatpush1.xpose.msra.mxu0 0.0
        %1423 = vmatprep.subr.mxu0 0.0
        %1424 = vmatpush1.xpose.msra.mxu0 0.0
        %1425 = vmatprep.subr.mxu0 0.0
        %1426 = vmatpush1.xpose.msra.mxu0 0.0
        %1427 = vmatprep.subr.mxu0 0.0
        %1428 = vmatpush1.xpose.msra.mxu0 0.0
        %1429 = vmatprep.subr.mxu0 0.0
        %1430 = vmatpush1.xpose.msra.mxu0 0.0
        %1431 = vmatprep.subr.mxu0 0.0
        %1432 = vmatpush1.xpose.msra.mxu0 0.0
        %1433 = vmatprep.subr.mxu0 0.0
        %1434 = vmatpush1.xpose.msra.mxu0 0.0
        %1435 = vmatprep.subr.mxu0 0.0
        %1436 = vmatpush1.xpose.msra.mxu0 0.0
        %1437 = vmatprep.subr.mxu0 0.0
        %1438 = vmatpush1.xpose.msra.mxu0 0.0
        %1439 = vmatprep.subr.mxu0 0.0
        %1440 = vmatpush1.xpose.msra.mxu0 0.0
        %1441 = vmatprep.subr.mxu0 0.0
        %1442 = vmatpush1.xpose.msra.mxu0 0.0
        %1443 = vmatprep.subr.mxu0 0.0
        %1444 = vmatpush1.xpose.msra.mxu0 0.0
        %1445 = vmatprep.subr.mxu0 0.0
        %1446 = vmatpush1.xpose.msra.mxu0 0.0
        %1447 = vmatprep.subr.mxu0 0.0
        %1448 = vmatpush1.xpose.msra.mxu0 0.0
        %1449 = vmatprep.subr.mxu0 0.0
        %1450 = vmatpush1.xpose.msra.mxu0 0.0
        %1451 = vmatprep.subr.mxu0 0.0
        %1452 = vmatpush1.xpose.msra.mxu0 0.0
        %1453 = vmatprep.mubr.f32.mxu0 0.0
        %1454 = vmatmul.mubr.f32.gmra.mrb[0].mxu0 %v1193
        %v1455 = vpop.f32.mrb[0].mxu0
        %v1456 = vadd.f32 %v1387, %v1455
        %v1457 = vpop.f32.mrb[0].mxu0
        %1458 = vdwg.mxu0
        %vm1459 = vcmask 64512
        %v1460 = vsel %vm1459, %v1456, -inf
        %1461 = vmax.xlane.f32.xlu0 %v1460
        %v1462 = vpop.xlane.xlu0 %1461
        %v1463 = vsub.f32 %v1456, %v1462
        %v1464 = vmul.f32 %v1463, 1.442695
        %v1465 = vpow.pop %v1464
        %v1466 = vsel %vm1459, %v1465, 0.0
        %1467 = vadd.xlane.f32.xlu0 %v1466
        %v1468 = vpop.xlane.xlu0 %1467
        %v1469 = vrcp.pop %v1468
        %v1470 = vmul.f32 %v1465, %v1469
        %v1472 = vsel %vm1459, %v1470, 0
        %1474 = vmatprep.subr.mxu0 0.0
        %1475 = vmatpush1.msra.mxu0 %v1377
        %1476 = vmatprep.subr.mxu0 0.0
        %1477 = vmatpush1.msra.mxu0 0.0
        %1478 = vmatprep.subr.mxu0 0.0
        %1479 = vmatpush1.msra.mxu0 0.0
        %1480 = vmatprep.subr.mxu0 0.0
        %1481 = vmatpush1.msra.mxu0 0.0
        %1482 = vmatprep.subr.mxu0 0.0
        %1483 = vmatpush1.msra.mxu0 0.0
        %1484 = vmatprep.subr.mxu0 0.0
        %1485 = vmatpush1.msra.mxu0 0.0
        %1486 = vmatprep.subr.mxu0 0.0
        %1487 = vmatpush1.msra.mxu0 0.0
        %1488 = vmatprep.subr.mxu0 0.0
        %1489 = vmatpush1.msra.mxu0 0.0
        %1490 = vmatprep.subr.mxu0 0.0
        %1491 = vmatpush1.msra.mxu0 0.0
        %1492 = vmatprep.subr.mxu0 0.0
        %1493 = vmatpush1.msra.mxu0 0.0
        %1494 = vmatprep.subr.mxu0 0.0
        %1495 = vmatpush1.msra.mxu0 0.0
        %1496 = vmatprep.subr.mxu0 0.0
        %1497 = vmatpush1.msra.mxu0 0.0
        %1498 = vmatprep.subr.mxu0 0.0
        %1499 = vmatpush1.msra.mxu0 0.0
        %1500 = vmatprep.subr.mxu0 0.0
        %1501 = vmatpush1.msra.mxu0 0.0
        %1502 = vmatprep.subr.mxu0 0.0
        %1503 = vmatpush1.msra.mxu0 0.0
        %1504 = vmatprep.subr.mxu0 0.0
        %1505 = vmatpush1.msra.mxu0 0.0
        %1506 = vmatprep.subr.mxu0 0.0
        %1507 = vmatpush1.msra.mxu0 0.0
        %1508 = vmatprep.subr.mxu0 0.0
        %1509 = vmatpush1.msra.mxu0 0.0
        %1510 = vmatprep.subr.mxu0 0.0
        %1511 = vmatpush1.msra.mxu0 0.0
        %1512 = vmatprep.subr.mxu0 0.0
        %1513 = vmatpush1.msra.mxu0 0.0
        %1514 = vmatprep.subr.mxu0 0.0
        %1515 = vmatpush1.msra.mxu0 0.0
        %1516 = vmatprep.subr.mxu0 0.0
        %1517 = vmatpush1.msra.mxu0 0.0
        %1518 = vmatprep.subr.mxu0 0.0
        %1519 = vmatpush1.msra.mxu0 0.0
        %1520 = vmatprep.subr.mxu0 0.0
        %1521 = vmatpush1.msra.mxu0 0.0
        %1522 = vmatprep.subr.mxu0 0.0
        %1523 = vmatpush1.msra.mxu0 0.0
        %1524 = vmatprep.subr.mxu0 0.0
        %1525 = vmatpush1.msra.mxu0 0.0
        %1526 = vmatprep.subr.mxu0 0.0
        %1527 = vmatpush1.msra.mxu0 0.0
        %1528 = vmatprep.subr.mxu0 0.0
        %1529 = vmatpush1.msra.mxu0 0.0
        %1530 = vmatprep.subr.mxu0 0.0
        %1531 = vmatpush1.msra.mxu0 0.0
        %1532 = vmatprep.subr.mxu0 0.0
        %1533 = vmatpush1.msra.mxu0 0.0
        %1534 = vmatprep.subr.mxu0 0.0
        %1535 = vmatpush1.msra.mxu0 0.0
        %1536 = vmatprep.subr.mxu0 0.0
        %1537 = vmatpush1.msra.mxu0 0.0
        %1538 = vmatprep.mubr.f32.mxu0 0.0
        %1539 = vmatmul.mubr.f32.gmra.mrb[0].mxu0 %v1472
        %v1540 = vpop.f32.mrb[0].mxu0
        %v1541 = vadd.f32 0.0, %v1540
        %v1542 = vpop.f32.mrb[0].mxu0
        %1543 = vdwg.mxu0
        %v1544 = vld [vmem:[#allocation7] sm:$0xff]
        %v1545 = vld [vmem:[#allocation7 + $0x8] sm:$0xff]
        %v1546 = vld [vmem:[#allocation7 + $0x10] sm:$0xff]
        %v1547 = vld [vmem:[#allocation7 + $0x18] sm:$0xff]
        %v1548 = vld [vmem:[#allocation7 + $0x20] sm:$0xff]
        %v1549 = vld [vmem:[#allocation7 + $0x28] sm:$0xff]
        %v1550 = vld [vmem:[#allocation7 + $0x30] sm:$0xff]
        %v1551 = vld [vmem:[#allocation7 + $0x38] sm:$0xff]
        %v1552 = vld [vmem:[#allocation7 + $0x40] sm:$0xff]
        %v1553 = vld [vmem:[#allocation7 + $0x48] sm:$0xff]
        %v1554 = vld [vmem:[#allocation7 + $0x50] sm:$0xff]
        %v1555 = vld [vmem:[#allocation7 + $0x58] sm:$0xff]
        %v1556 = vld [vmem:[#allocation7 + $0x60] sm:$0xff]
        %v1557 = vld [vmem:[#allocation7 + $0x68] sm:$0xff]
        %v1558 = vld [vmem:[#allocation7 + $0x70] sm:$0xff]
        %v1559 = vld [vmem:[#allocation7 + $0x78] sm:$0xff]
        %v1560 = vld [vmem:[%s23] sm:$0x1]
        %v1562 = vlaneseq
        %v1563 = vshrl.u32 %v1562, 7
        %v1564 = vsub.s32 0, %v1563
        %v1565 = vrot.slane %v1560, %v1564
        %1567 = vmatprep.subr.mxu0 0.0
        %1568 = vmatpush1.msra.mxu0 %v1544
        %1569 = vmatprep.subr.mxu0 0.0
        %1570 = vmatpush1.msra.mxu0 %v1545
        %1571 = vmatprep.subr.mxu0 0.0
        %1572 = vmatpush1.msra.mxu0 %v1546
        %1573 = vmatprep.subr.mxu0 0.0
        %1574 = vmatpush1.msra.mxu0 %v1547
        %1575 = vmatprep.subr.mxu0 0.0
        %1576 = vmatpush1.msra.mxu0 %v1548
        %1577 = vmatprep.subr.mxu0 0.0
        %1578 = vmatpush1.msra.mxu0 %v1549
        %1579 = vmatprep.subr.mxu0 0.0
        %1580 = vmatpush1.msra.mxu0 %v1550
        %1581 = vmatprep.subr.mxu0 0.0
        %1582 = vmatpush1.msra.mxu0 %v1551
        %1583 = vmatprep.subr.mxu0 0.0
        %1584 = vmatpush1.msra.mxu0 %v1552
        %1585 = vmatprep.subr.mxu0 0.0
        %1586 = vmatpush1.msra.mxu0 %v1553
        %1587 = vmatprep.subr.mxu0 0.0
        %1588 = vmatpush1.msra.mxu0 %v1554
        %1589 = vmatprep.subr.mxu0 0.0
        %1590 = vmatpush1.msra.mxu0 %v1555
        %1591 = vmatprep.subr.mxu0 0.0
        %1592 = vmatpush1.msra.mxu0 %v1556
        %1593 = vmatprep.subr.mxu0 0.0
        %1594 = vmatpush1.msra.mxu0 %v1557
        %1595 = vmatprep.subr.mxu0 0.0
        %1596 = vmatpush1.msra.mxu0 %v1558
        %1597 = vmatprep.subr.mxu0 0.0
        %1598 = vmatpush1.msra.mxu0 %v1559
        %1599 = vmatprep.subr.mxu0 0.0
        %1600 = vmatpush1.msra.mxu0 0.0
        %1601 = vmatprep.subr.mxu0 0.0
        %1602 = vmatpush1.msra.mxu0 0.0
        %1603 = vmatprep.subr.mxu0 0.0
        %1604 = vmatpush1.msra.mxu0 0.0
        %1605 = vmatprep.subr.mxu0 0.0
        %1606 = vmatpush1.msra.mxu0 0.0
        %1607 = vmatprep.subr.mxu0 0.0
        %1608 = vmatpush1.msra.mxu0 0.0
        %1609 = vmatprep.subr.mxu0 0.0
        %1610 = vmatpush1.msra.mxu0 0.0
        %1611 = vmatprep.subr.mxu0 0.0
        %1612 = vmatpush1.msra.mxu0 0.0
        %1613 = vmatprep.subr.mxu0 0.0
        %1614 = vmatpush1.msra.mxu0 0.0
        %1615 = vmatprep.subr.mxu0 0.0
        %1616 = vmatpush1.msra.mxu0 0.0
        %1617 = vmatprep.subr.mxu0 0.0
        %1618 = vmatpush1.msra.mxu0 0.0
        %1619 = vmatprep.subr.mxu0 0.0
        %1620 = vmatpush1.msra.mxu0 0.0
        %1621 = vmatprep.subr.mxu0 0.0
        %1622 = vmatpush1.msra.mxu0 0.0
        %1623 = vmatprep.subr.mxu0 0.0
        %1624 = vmatpush1.msra.mxu0 0.0
        %1625 = vmatprep.subr.mxu0 0.0
        %1626 = vmatpush1.msra.mxu0 0.0
        %1627 = vmatprep.subr.mxu0 0.0
        %1628 = vmatpush1.msra.mxu0 0.0
        %1629 = vmatprep.subr.mxu0 0.0
        %1630 = vmatpush1.msra.mxu0 0.0
        %1631 = vmatprep.mubr.f32.mxu0 0.0
        %1632 = vmatmul.mubr.f32.gmra.mrb[0].mxu0 %v1541
        %v1633 = vpop.f32.mrb[0].mxu0
        %v1634 = vadd.f32 %v1565, %v1633
        %v1635 = vpop.f32.mrb[0].mxu0
        %1636 = vdwg.mxu0
        %v1637 = vadd.f32 %v1099, %v1634
        %v1638 = vld [vmem:[%s25] sm:$0x1]
        %v1639 = vld [vmem:[%s27] sm:$0x1]
        %1640 = vadd.xlane.f32.xlu0 %v1637
        %v1641 = vpop.xlane.xlu0 %1640
        %v1642 = vmul.f32 %v1637, %v1637
        %1643 = vadd.xlane.f32.xlu0 %v1642
        %v1644 = vpop.xlane.xlu0 %1643
        %v1645 = vmul.f32 %v1641, 0.03125
        %v1646 = vmul.f32 %v1644, 0.03125
        %v1647 = vmul.f32 %v1645, %v1645
        %v1648 = vsub.f32 %v1646, %v1647
        %v1649 = vsub.f32 %v1637, %v1645
        %v1650 = vadd.f32 %v1648, 1e-05
        %v1651 = vrsqrt.pop %v1650
        %v1652 = vmul.f32 %v1649, %v1651
        %v1654 = vlaneseq
        %v1655 = vshrl.u32 %v1654, 7
        %v1656 = vsub.s32 0, %v1655
        %v1657 = vrot.slane %v1638, %v1656
        %v1659 = vmul.f32 %v1652, %v1657
        %v1661 = vlaneseq
        %v1662 = vshrl.u32 %v1661, 7
        %v1663 = vsub.s32 0, %v1662
        %v1664 = vrot.slane %v1639, %v1663
        %v1666 = vadd.f32 %v1659, %v1664
        %v1667 = vld [vmem:[#allocation8] sm:$0xff]
        %v1668 = vld [vmem:[#allocation8 + $0x8] sm:$0xff]
        %v1669 = vld [vmem:[#allocation8 + $0x10] sm:$0xff]
        %v1670 = vld [vmem:[#allocation8 + $0x18] sm:$0xff]
        %v1671 = vld [vmem:[#allocation8 + $0x20] sm:$0xff]
        %v1672 = vld [vmem:[#allocation8 + $0x28] sm:$0xff]
        %v1673 = vld [vmem:[#allocation8 + $0x30] sm:$0xff]
        %v1674 = vld [vmem:[#allocation8 + $0x38] sm:$0xff]
        %v1675 = vld [vmem:[#allocation8 + $0x40] sm:$0xff]
        %v1676 = vld [vmem:[#allocation8 + $0x48] sm:$0xff]
        %v1677 = vld [vmem:[#allocation8 + $0x50] sm:$0xff]
        %v1678 = vld [vmem:[#allocation8 + $0x58] sm:$0xff]
        %v1679 = vld [vmem:[#allocation8 + $0x60] sm:$0xff]
        %v1680 = vld [vmem:[#allocation8 + $0x68] sm:$0xff]
        %v1681 = vld [vmem:[#allocation8 + $0x70] sm:$0xff]
        %v1682 = vld [vmem:[#allocation8 + $0x78] sm:$0xff]
        %v1683 = vld [vmem:[%s31] sm:$0x1]
        %v1685 = vlaneseq
        %v1686 = vshrl.u32 %v1685, 7
        %v1687 = vsub.s32 0, %v1686
        %v1688 = vrot.slane %v1683, %v1687
        %1690 = vmatprep.subr.mxu0 0.0
        %1691 = vmatpush1.msra.mxu0 %v1667
        %1692 = vmatprep.subr.mxu0 0.0
        %1693 = vmatpush1.msra.mxu0 %v1668
        %1694 = vmatprep.subr.mxu0 0.0
        %1695 = vmatpush1.msra.mxu0 %v1669
        %1696 = vmatprep.subr.mxu0 0.0
        %1697 = vmatpush1.msra.mxu0 %v1670
        %1698 = vmatprep.subr.mxu0 0.0
        %1699 = vmatpush1.msra.mxu0 %v1671
        %1700 = vmatprep.subr.mxu0 0.0
        %1701 = vmatpush1.msra.mxu0 %v1672
        %1702 = vmatprep.subr.mxu0 0.0
        %1703 = vmatpush1.msra.mxu0 %v1673
        %1704 = vmatprep.subr.mxu0 0.0
        %1705 = vmatpush1.msra.mxu0 %v1674
        %1706 = vmatprep.subr.mxu0 0.0
        %1707 = vmatpush1.msra.mxu0 %v1675
        %1708 = vmatprep.subr.mxu0 0.0
        %1709 = vmatpush1.msra.mxu0 %v1676
        %1710 = vmatprep.subr.mxu0 0.0
        %1711 = vmatpush1.msra.mxu0 %v1677
        %1712 = vmatprep.subr.mxu0 0.0
        %1713 = vmatpush1.msra.mxu0 %v1678
        %1714 = vmatprep.subr.mxu0 0.0
        %1715 = vmatpush1.msra.mxu0 %v1679
        %1716 = vmatprep.subr.mxu0 0.0
        %1717 = vmatpush1.msra.mxu0 %v1680
        %1718 = vmatprep.subr.mxu0 0.0
        %1719 = vmatpush1.msra.mxu0 %v1681
        %1720 = vmatprep.subr.mxu0 0.0
        %1721 = vmatpush1.msra.mxu0 %v1682
        %1722 = vmatprep.subr.mxu0 0.0
        %1723 = vmatpush1.msra.mxu0 0.0
        %1724 = vmatprep.subr.mxu0 0.0
        %1725 = vmatpush1.msra.mxu0 0.0
        %1726 = vmatprep.subr.mxu0 0.0
        %1727 = vmatpush1.msra.mxu0 0.0
        %1728 = vmatprep.subr.mxu0 0.0
        %1729 = vmatpush1.msra.mxu0 0.0
        %1730 = vmatprep.subr.mxu0 0.0
        %1731 = vmatpush1.msra.mxu0 0.0
        %1732 = vmatprep.subr.mxu0 0.0
        %1733 = vmatpush1.msra.mxu0 0.0
        %1734 = vmatprep.subr.mxu0 0.0
        %1735 = vmatpush1.msra.mxu0 0.0
        %1736 = vmatprep.subr.mxu0 0.0
        %1737 = vmatpush1.msra.mxu0 0.0
        %1738 = vmatprep.subr.mxu0 0.0
        %1739 = vmatpush1.msra.mxu0 0.0
        %1740 = vmatprep.subr.mxu0 0.0
        %1741 = vmatpush1.msra.mxu0 0.0
        %1742 = vmatprep.subr.mxu0 0.0
        %1743 = vmatpush1.msra.mxu0 0.0
        %1744 = vmatprep.subr.mxu0 0.0
        %1745 = vmatpush1.msra.mxu0 0.0
        %1746 = vmatprep.subr.mxu0 0.0
        %1747 = vmatpush1.msra.mxu0 0.0
        %1748 = vmatprep.subr.mxu0 0.0
        %1749 = vmatpush1.msra.mxu0 0.0
        %1750 = vmatprep.subr.mxu0 0.0
        %1751 = vmatpush1.msra.mxu0 0.0
        %1752 = vmatprep.subr.mxu0 0.0
        %1753 = vmatpush1.msra.mxu0 0.0
        %1754 = vmatprep.mubr.f32.mxu0 0.0
        %1755 = vmatmul.mubr.f32.gmra.mrb[0].mxu0 %v1666
        %v1756 = vpop.f32.mrb[0].mxu0
        %v1757 = vadd.f32 %v1688, %v1756
        %v1758 = vpop.f32.mrb[0].mxu0
        %1759 = vdwg.mxu0
        %v1760 = vmul.f32 %v1757, 0.5
        %v1761 = vmul.f32 %v1757, 0.70710677
        %v1762 = verf.f32.pop %v1761
        %v1763 = vadd.f32 %v1762, 1.0
        %v1764 = vmul.f32 %v1760, %v1763
        %v1765 = vld [vmem:[#allocation10] sm:$0xff]
        %v1766 = vld [vmem:[#allocation10 + $0x8] sm:$0xff]
        %v1767 = vld [vmem:[#allocation10 + $0x10] sm:$0xff]
        %v1768 = vld [vmem:[#allocation10 + $0x18] sm:$0xff]
        %v1769 = vld [vmem:[#allocation10 + $0x20] sm:$0xff]
        %v1770 = vld [vmem:[#allocation10 + $0x28] sm:$0xff]
        %v1771 = vld [vmem:[#allocation10 + $0x30] sm:$0xff]
        %v1772 = vld [vmem:[#allocation10 + $0x38] sm:$0xff]
        %v1773 = vld [vmem:[#allocation10 + $0x40] sm:$0xff]
        %v1774 = vld [vmem:[#allocation10 + $0x48] sm:$0xff]
        %v1775 = vld [vmem:[#allocation10 + $0x50] sm:$0xff]
        %v1776 = vld [vmem:[#allocation10 + $0x58] sm:$0xff]
        %v1777 = vld [vmem:[#allocation10 + $0x60] sm:$0xff]
        %v1778 = vld [vmem:[#allocation10 + $0x68] sm:$0xff]
        %v1779 = vld [vmem:[#allocation10 + $0x70] sm:$0xff]
        %v1780 = vld [vmem:[#allocation10 + $0x78] sm:$0xff]
        %v1781 = vld [vmem:[%s35] sm:$0x1]
        %v1783 = vlaneseq
        %v1784 = vshrl.u32 %v1783, 7
        %v1785 = vsub.s32 0, %v1784
        %v1786 = vrot.slane %v1781, %v1785
        %1788 = vmatprep.subr.mxu0 0.0
        %1789 = vmatpush1.msra.mxu0 %v1765
        %1790 = vmatprep.subr.mxu0 0.0
        %1791 = vmatpush1.msra.mxu0 %v1766
        %1792 = vmatprep.subr.mxu0 0.0
        %1793 = vmatpush1.msra.mxu0 %v1767
        %1794 = vmatprep.subr.mxu0 0.0
        %1795 = vmatpush1.msra.mxu0 %v1768
        %1796 = vmatprep.subr.mxu0 0.0
        %1797 = vmatpush1.msra.mxu0 %v1769
        %1798 = vmatprep.subr.mxu0 0.0
        %1799 = vmatpush1.msra.mxu0 %v1770
        %1800 = vmatprep.subr.mxu0 0.0
        %1801 = vmatpush1.msra.mxu0 %v1771
        %1802 = vmatprep.subr.mxu0 0.0
        %1803 = vmatpush1.msra.mxu0 %v1772
        %1804 = vmatprep.subr.mxu0 0.0
        %1805 = vmatpush1.msra.mxu0 %v1773
        %1806 = vmatprep.subr.mxu0 0.0
        %1807 = vmatpush1.msra.mxu0 %v1774
        %1808 = vmatprep.subr.mxu0 0.0
        %1809 = vmatpush1.msra.mxu0 %v1775
        %1810 = vmatprep.subr.mxu0 0.0
        %1811 = vmatpush1.msra.mxu0 %v1776
        %1812 = vmatprep.subr.mxu0 0.0
        %1813 = vmatpush1.msra.mxu0 %v1777
        %1814 = vmatprep.subr.mxu0 0.0
        %1815 = vmatpush1.msra.mxu0 %v1778
        %1816 = vmatprep.subr.mxu0 0.0
        %1817 = vmatpush1.msra.mxu0 %v1779
        %1818 = vmatprep.subr.mxu0 0.0
        %1819 = vmatpush1.msra.mxu0 %v1780
        %1820 = vmatprep.subr.mxu0 0.0
        %1821 = vmatpush1.msra.mxu0 0.0
        %1822 = vmatprep.subr.mxu0 0.0
        %1823 = vmatpush1.msra.mxu0 0.0
        %1824 = vmatprep.subr.mxu0 0.0
        %1825 = vmatpush1.msra.mxu0 0.0
        %1826 = vmatprep.subr.mxu0 0.0
        %1827 = vmatpush1.msra.mxu0 0.0
        %1828 = vmatprep.subr.mxu0 0.0
        %1829 = vmatpush1.msra.mxu0 0.0
        %1830 = vmatprep.subr.mxu0 0.0
        %1831 = vmatpush1.msra.mxu0 0.0
        %1832 = vmatprep.subr.mxu0 0.0
        %1833 = vmatpush1.msra.mxu0 0.0
        %1834 = vmatprep.subr.mxu0 0.0
        %1835 = vmatpush1.msra.mxu0 0.0
        %1836 = vmatprep.subr.mxu0 0.0
        %1837 = vmatpush1.msra.mxu0 0.0
        %1838 = vmatprep.subr.mxu0 0.0
        %1839 = vmatpush1.msra.mxu0 0.0
        %1840 = vmatprep.subr.mxu0 0.0
        %1841 = vmatpush1.msra.mxu0 0.0
        %1842 = vmatprep.subr.mxu0 0.0
        %1843 = vmatpush1.msra.mxu0 0.0
        %1844 = vmatprep.subr.mxu0 0.0
        %1845 = vmatpush1.msra.mxu0 0.0
        %1846 = vmatprep.subr.mxu0 0.0
        %1847 = vmatpush1.msra.mxu0 0.0
        %1848 = vmatprep.subr.mxu0 0.0
        %1849 = vmatpush1.msra.mxu0 0.0
        %1850 = vmatprep.subr.mxu0 0.0
        %1851 = vmatpush1.msra.mxu0 0.0
        %1852 = vmatprep.mubr.f32.mxu0 0.0
        %1853 = vmatmul.mubr.f32.gmra.mrb[0].mxu0 %v1764
        %v1854 = vpop.f32.mrb[0].mxu0
        %v1855 = vadd.f32 %v1786, %v1854
        %v1856 = vpop.f32.mrb[0].mxu0
        %1857 = vdwg.mxu0
        %v1858 = vadd.f32 %v1666, %v1855
        %v1859 = vld [vmem:[%s37] sm:$0x1]
        %v1860 = vld [vmem:[%s39] sm:$0x1]
        %1861 = vadd.xlane.f32.xlu0 %v1858
        %v1862 = vpop.xlane.xlu0 %1861
        %v1863 = vmul.f32 %v1858, %v1858
        %1864 = vadd.xlane.f32.xlu0 %v1863
        %v1865 = vpop.xlane.xlu0 %1864
        %v1866 = vmul.f32 %v1862, 0.03125
        %v1867 = vmul.f32 %v1865, 0.03125
        %v1868 = vmul.f32 %v1866, %v1866
        %v1869 = vsub.f32 %v1867, %v1868
        %v1870 = vsub.f32 %v1858, %v1866
        %v1871 = vadd.f32 %v1869, 1e-05
        %v1872 = vrsqrt.pop %v1871
        %v1873 = vmul.f32 %v1870, %v1872
        %v1875 = vlaneseq
        %v1876 = vshrl.u32 %v1875, 7
        %v1877 = vsub.s32 0, %v1876
        %v1878 = vrot.slane %v1859, %v1877
        %v1880 = vmul.f32 %v1873, %v1878
        %v1882 = vlaneseq
        %v1883 = vshrl.u32 %v1882, 7
        %v1884 = vsub.s32 0, %v1883
        %v1885 = vrot.slane %v1860, %v1884
        %v1887 = vadd.f32 %v1880, %v1885
        %v1888 = vld [vmem:[#allocation11] sm:$0xff]
        %v1889 = vld [vmem:[#allocation11 + $0x8] sm:$0xff]
        %v1890 = vld [vmem:[#allocation11 + $0x10] sm:$0xff]
        %v1891 = vld [vmem:[#allocation11 + $0x18] sm:$0xff]
        %v1892 = vld [vmem:[#allocation11 + $0x20] sm:$0xff]
        %v1893 = vld [vmem:[#allocation11 + $0x28] sm:$0xff]
        %v1894 = vld [vmem:[#allocation11 + $0x30] sm:$0xff]
        %v1895 = vld [vmem:[#allocation11 + $0x38] sm:$0xff]
        %v1896 = vld [vmem:[#allocation11 + $0x40] sm:$0xff]
        %v1897 = vld [vmem:[#allocation11 + $0x48] sm:$0xff]
        %v1898 = vld [vmem:[#allocation11 + $0x50] sm:$0xff]
        %v1899 = vld [vmem:[#allocation11 + $0x58] sm:$0xff]
        %v1900 = vld [vmem:[#allocation11 + $0x60] sm:$0xff]
        %v1901 = vld [vmem:[#allocation11 + $0x68] sm:$0xff]
        %v1902 = vld [vmem:[#allocation11 + $0x70] sm:$0xff]
        %v1903 = vld [vmem:[#allocation11 + $0x78] sm:$0xff]
        %v1904 = vld [vmem:[%s43] sm:$0x1]
        %1905 = vmatprep.subr.mxu0 0.0
        %1906 = vmatpush1.msra.mxu0 %v1888
        %1907 = vmatprep.subr.mxu0 0.0
        %1908 = vmatpush1.msra.mxu0 %v1889
        %1909 = vmatprep.subr.mxu0 0.0
        %1910 = vmatpush1.msra.mxu0 %v1890
        %1911 = vmatprep.subr.mxu0 0.0
        %1912 = vmatpush1.msra.mxu0 %v1891
        %1913 = vmatprep.subr.mxu0 0.0
        %1914 = vmatpush1.msra.mxu0 %v1892
        %1915 = vmatprep.subr.mxu0 0.0
        %1916 = vmatpush1.msra.mxu0 %v1893
        %1917 = vmatprep.subr.mxu0 0.0
        %1918 = vmatpush1.msra.mxu0 %v1894
        %1919 = vmatprep.subr.mxu0 0.0
        %1920 = vmatpush1.msra.mxu0 %v1895
        %1921 = vmatprep.subr.mxu0 0.0
        %1922 = vmatpush1.msra.mxu0 %v1896
        %1923 = vmatprep.subr.mxu0 0.0
        %1924 = vmatpush1.msra.mxu0 %v1897
        %1925 = vmatprep.subr.mxu0 0.0
        %1926 = vmatpush1.msra.mxu0 %v1898
        %1927 = vmatprep.subr.mxu0 0.0
        %1928 = vmatpush1.msra.mxu0 %v1899
        %1929 = vmatprep.subr.mxu0 0.0
        %1930 = vmatpush1.msra.mxu0 %v1900
        %1931 = vmatprep.subr.mxu0 0.0
        %1932 = vmatpush1.msra.mxu0 %v1901
        %1933 = vmatprep.subr.mxu0 0.0
        %1934 = vmatpush1.msra.mxu0 %v1902
        %1935 = vmatprep.subr.mxu0 0.0
        %1936 = vmatpush1.msra.mxu0 %v1903
        %1937 = vmatprep.subr.mxu0 0.0
        %1938 = vmatpush1.msra.mxu0 0.0
        %1939 = vmatprep.subr.mxu0 0.0
        %1940 = vmatpush1.msra.mxu0 0.0
        %1941 = vmatprep.subr.mxu0 0.0
        %1942 = vmatpush1.msra.mxu0 0.0
        %1943 = vmatprep.subr.mxu0 0.0
        %1944 = vmatpush1.msra.mxu0 0.0
        %1945 = vmatprep.subr.mxu0 0.0
        %1946 = vmatpush1.msra.mxu0 0.0
        %1947 = vmatprep.subr.mxu0 0.0
        %1948 = vmatpush1.msra.mxu0 0.0
        %1949 = vmatprep.subr.mxu0 0.0
        %1950 = vmatpush1.msra.mxu0 0.0
        %1951 = vmatprep.subr.mxu0 0.0
        %1952 = vmatpush1.msra.mxu0 0.0
        %1953 = vmatprep.subr.mxu0 0.0
        %1954 = vmatpush1.msra.mxu0 0.0
        %1955 = vmatprep.subr.mxu0 0.0
        %1956 = vmatpush1.msra.mxu0 0.0
        %1957 = vmatprep.subr.mxu0 0.0
        %1958 = vmatpush1.msra.mxu0 0.0
        %1959 = vmatprep.subr.mxu0 0.0
        %1960 = vmatpush1.msra.mxu0 0.0
        %1961 = vmatprep.subr.mxu0 0.0
        %1962 = vmatpush1.msra.mxu0 0.0
        %1963 = vmatprep.subr.mxu0 0.0
        %1964 = vmatpush1.msra.mxu0 0.0
        %1965 = vmatprep.subr.mxu0 0.0
        %1966 = vmatpush1.msra.mxu0 0.0
        %1967 = vmatprep.subr.mxu0 0.0
        %1968 = vmatpush1.msra.mxu0 0.0
        %1969 = vmatprep.mubr.f32.mxu0 0.0
        %1970 = vmatmul.mubr.f32.gmra.mrb[0].mxu0 %v1887
        %v1971 = vpop.f32.mrb[0].mxu0
        %v1972 = vadd.f32 %v1904, %v1971
        %v1973 = vpop.f32.mrb[0].mxu0
        %1974 = vdwg.mxu0
        %v1975 = vtanh.pop %v1972
        %v1976 = vld [vmem:[%s45] sm:$0x1]
        %v1977 = vld [vmem:[%s47] sm:$0x1]
        %vm1978 = vcmask 1040384
        %v1979 = vsel %vm1978, %v1975, 0.0
        %1980 = vadd.xlane.f32.xlu0 %v1979
        %v1981 = vpop.xlane.xlu0 %1980
        %v1982 = vmul.f32 %v1975, %v1975
        %v1983 = vsel %vm1978, %v1982, 0.0
        %1984 = vadd.xlane.f32.xlu0 %v1983
        %v1985 = vpop.xlane.xlu0 %1984
        %v1986 = vmul.f32 %v1981, 0.03125
        %v1987 = vmul.f32 %v1985, 0.03125
        %v1988 = vmul.f32 %v1986, %v1986
        %v1989 = vsub.f32 %v1987, %v1988
        %v1990 = vsub.f32 %v1975, %v1986
        %v1991 = vadd.f32 %v1989, 1e-05
        %v1992 = vrsqrt.pop %v1991
        %v1993 = vmul.f32 %v1990, %v1992
        %v1994 = vmul.f32 %v1993, %v1976
        %v1995 = vadd.f32 %v1994, %v1977
        %v1996 = vld [vmem:[#allocation13] sm:$0xff]
        %v1997 = vld [vmem:[#allocation13 + $0x8] sm:$0xff]
        %v1998 = vld [vmem:[#allocation13 + $0x10] sm:$0xff]
        %v1999 = vld [vmem:[#allocation13 + $0x18] sm:$0xff]
        %v2000 = vld [vmem:[#allocation13 + $0x20] sm:$0xff]
        %v2001 = vld [vmem:[#allocation13 + $0x28] sm:$0xff]
        %v2002 = vld [vmem:[#allocation13 + $0x30] sm:$0xff]
        %v2003 = vld [vmem:[#allocation13 + $0x38] sm:$0xff]
        %v2004 = vld [vmem:[#allocation13 + $0x40] sm:$0xff]
        %v2005 = vld [vmem:[#allocation13 + $0x48] sm:$0xff]
        %v2006 = vld [vmem:[#allocation13 + $0x50] sm:$0xff]
        %v2007 = vld [vmem:[#allocation13 + $0x58] sm:$0xff]
        %v2008 = vld [vmem:[#allocation13 + $0x60] sm:$0xff]
        %v2009 = vld [vmem:[#allocation13 + $0x68] sm:$0xff]
        %v2010 = vld [vmem:[#allocation13 + $0x70] sm:$0xff]
        %v2011 = vld [vmem:[#allocation13 + $0x78] sm:$0xff]
        %v2012 = vld [vmem:[%s51] sm:$0x1]
        %2013 = vmatprep.subr.mxu0 0.0
        %2014 = vmatpush1.msra.mxu0 %v1996
        %2015 = vmatprep.subr.mxu0 0.0
        %2016 = vmatpush1.msra.mxu0 %v1997
        %2017 = vmatprep.subr.mxu0 0.0
        %2018 = vmatpush1.msra.mxu0 %v1998
        %2019 = vmatprep.subr.mxu0 0.0
        %2020 = vmatpush1.msra.mxu0 %v1999
        %2021 = vmatprep.subr.mxu0 0.0
        %2022 = vmatpush1.msra.mxu0 %v2000
        %2023 = vmatprep.subr.mxu0 0.0
        %2024 = vmatpush1.msra.mxu0 %v2001
        %2025 = vmatprep.subr.mxu0 0.0
        %2026 = vmatpush1.msra.mxu0 %v2002
        %2027 = vmatprep.subr.mxu0 0.0
        %2028 = vmatpush1.msra.mxu0 %v2003
        %2029 = vmatprep.subr.mxu0 0.0
        %2030 = vmatpush1.msra.mxu0 %v2004
        %2031 = vmatprep.subr.mxu0 0.0
        %2032 = vmatpush1.msra.mxu0 %v2005
        %2033 = vmatprep.subr.mxu0 0.0
        %2034 = vmatpush1.msra.mxu0 %v2006
        %2035 = vmatprep.subr.mxu0 0.0
        %2036 = vmatpush1.msra.mxu0 %v2007
        %2037 = vmatprep.subr.mxu0 0.0
        %2038 = vmatpush1.msra.mxu0 %v2008
        %2039 = vmatprep.subr.mxu0 0.0
        %2040 = vmatpush1.msra.mxu0 %v2009
        %2041 = vmatprep.subr.mxu0 0.0
        %2042 = vmatpush1.msra.mxu0 %v2010
        %2043 = vmatprep.subr.mxu0 0.0
        %2044 = vmatpush1.msra.mxu0 %v2011
        %2045 = vmatprep.subr.mxu0 0.0
        %2046 = vmatpush1.msra.mxu0 0.0
        %2047 = vmatprep.subr.mxu0 0.0
        %2048 = vmatpush1.msra.mxu0 0.0
        %2049 = vmatprep.subr.mxu0 0.0
        %2050 = vmatpush1.msra.mxu0 0.0
        %2051 = vmatprep.subr.mxu0 0.0
        %2052 = vmatpush1.msra.mxu0 0.0
        %2053 = vmatprep.subr.mxu0 0.0
        %2054 = vmatpush1.msra.mxu0 0.0
        %2055 = vmatprep.subr.mxu0 0.0
        %2056 = vmatpush1.msra.mxu0 0.0
        %2057 = vmatprep.subr.mxu0 0.0
        %2058 = vmatpush1.msra.mxu0 0.0
        %2059 = vmatprep.subr.mxu0 0.0
        %2060 = vmatpush1.msra.mxu0 0.0
        %2061 = vmatprep.subr.mxu0 0.0
        %2062 = vmatpush1.msra.mxu0 0.0
        %2063 = vmatprep.subr.mxu0 0.0
        %2064 = vmatpush1.msra.mxu0 0.0
        %2065 = vmatprep.subr.mxu0 0.0
        %2066 = vmatpush1.msra.mxu0 0.0
        %2067 = vmatprep.subr.mxu0 0.0
        %2068 = vmatpush1.msra.mxu0 0.0
        %2069 = vmatprep.subr.mxu0 0.0
        %2070 = vmatpush1.msra.mxu0 0.0
        %2071 = vmatprep.subr.mxu0 0.0
        %2072 = vmatpush1.msra.mxu0 0.0
        %2073 = vmatprep.subr.mxu0 0.0
        %2074 = vmatpush1.msra.mxu0 0.0
        %2075 = vmatprep.subr.mxu0 0.0
        %2076 = vmatpush1.msra.mxu0 0.0
        %2077 = vmatprep.mubr.f32.mxu0 0.0
        %2078 = vmatmul.mubr.f32.gmra.mrb[0].mxu0 %v1995
        %v2079 = vpop.f32.mrb[0].mxu0
        %v2080 = vadd.f32 %v2012, %v2079
        %v2081 = vpop.f32.mrb[0].mxu0
        %2082 = vdwg.mxu0
        %v2083 = vmul.f32 %v2080, 0.5
        %v2084 = vmul.f32 %v2080, 0.70710677
        %v2085 = verf.f32.pop %v2084
        %v2086 = vadd.f32 %v2085, 1.0
        %v2087 = vmul.f32 %v2083, %v2086
        %v2088 = vadd.f32 %v2087, %v1995
        %v2089 = vld [vmem:[#allocation14] sm:$0xff]
        %v2090 = vld [vmem:[#allocation14 + $0x8] sm:$0xff]
        %v2091 = vld [vmem:[#allocation14 + $0x10] sm:$0xff]
        %v2092 = vld [vmem:[#allocation14 + $0x18] sm:$0xff]
        %v2093 = vld [vmem:[#allocation14 + $0x20] sm:$0xff]
        %v2094 = vld [vmem:[#allocation14 + $0x28] sm:$0xff]
        %v2095 = vld [vmem:[#allocation14 + $0x30] sm:$0xff]
        %v2096 = vld [vmem:[#allocation14 + $0x38] sm:$0xff]
        %v2097 = vld [vmem:[#allocation14 + $0x40] sm:$0xff]
        %v2098 = vld [vmem:[#allocation14 + $0x48] sm:$0xff]
        %v2099 = vld [vmem:[#allocation14 + $0x50] sm:$0xff]
        %v2100 = vld [vmem:[#allocation14 + $0x58] sm:$0xff]
        %v2101 = vld [vmem:[#allocation14 + $0x60] sm:$0xff]
        %v2102 = vld [vmem:[#allocation14 + $0x68] sm:$0xff]
        %v2103 = vld [vmem:[#allocation14 + $0x70] sm:$0xff]
        %v2104 = vld [vmem:[#allocation14 + $0x78] sm:$0xff]
        %v2105 = vld [vmem:[%s55] sm:$0x1]
        %2106 = vmatprep.subr.mxu0 0.0
        %2107 = vmatpush1.msra.mxu0 %v2089
        %2108 = vmatprep.subr.mxu0 0.0
        %2109 = vmatpush1.msra.mxu0 %v2090
        %2110 = vmatprep.subr.mxu0 0.0
        %2111 = vmatpush1.msra.mxu0 %v2091
        %2112 = vmatprep.subr.mxu0 0.0
        %2113 = vmatpush1.msra.mxu0 %v2092
        %2114 = vmatprep.subr.mxu0 0.0
        %2115 = vmatpush1.msra.mxu0 %v2093
        %2116 = vmatprep.subr.mxu0 0.0
        %2117 = vmatpush1.msra.mxu0 %v2094
        %2118 = vmatprep.subr.mxu0 0.0
        %2119 = vmatpush1.msra.mxu0 %v2095
        %2120 = vmatprep.subr.mxu0 0.0
        %2121 = vmatpush1.msra.mxu0 %v2096
        %2122 = vmatprep.subr.mxu0 0.0
        %2123 = vmatpush1.msra.mxu0 %v2097
        %2124 = vmatprep.subr.mxu0 0.0
        %2125 = vmatpush1.msra.mxu0 %v2098
        %2126 = vmatprep.subr.mxu0 0.0
        %2127 = vmatpush1.msra.mxu0 %v2099
        %2128 = vmatprep.subr.mxu0 0.0
        %2129 = vmatpush1.msra.mxu0 %v2100
        %2130 = vmatprep.subr.mxu0 0.0
        %2131 = vmatpush1.msra.mxu0 %v2101
        %2132 = vmatprep.subr.mxu0 0.0
        %2133 = vmatpush1.msra.mxu0 %v2102
        %2134 = vmatprep.subr.mxu0 0.0
        %2135 = vmatpush1.msra.mxu0 %v2103
        %2136 = vmatprep.subr.mxu0 0.0
        %2137 = vmatpush1.msra.mxu0 %v2104
        %2138 = vmatprep.subr.mxu0 0.0
        %2139 = vmatpush1.msra.mxu0 0.0
        %2140 = vmatprep.subr.mxu0 0.0
        %2141 = vmatpush1.msra.mxu0 0.0
        %2142 = vmatprep.subr.mxu0 0.0
        %2143 = vmatpush1.msra.mxu0 0.0
        %2144 = vmatprep.subr.mxu0 0.0
        %2145 = vmatpush1.msra.mxu0 0.0
        %2146 = vmatprep.subr.mxu0 0.0
        %2147 = vmatpush1.msra.mxu0 0.0
        %2148 = vmatprep.subr.mxu0 0.0
        %2149 = vmatpush1.msra.mxu0 0.0
        %2150 = vmatprep.subr.mxu0 0.0
        %2151 = vmatpush1.msra.mxu0 0.0
        %2152 = vmatprep.subr.mxu0 0.0
        %2153 = vmatpush1.msra.mxu0 0.0
        %2154 = vmatprep.subr.mxu0 0.0
        %2155 = vmatpush1.msra.mxu0 0.0
        %2156 = vmatprep.subr.mxu0 0.0
        %2157 = vmatpush1.msra.mxu0 0.0
        %2158 = vmatprep.subr.mxu0 0.0
        %2159 = vmatpush1.msra.mxu0 0.0
        %2160 = vmatprep.subr.mxu0 0.0
        %2161 = vmatpush1.msra.mxu0 0.0
        %2162 = vmatprep.subr.mxu0 0.0
        %2163 = vmatpush1.msra.mxu0 0.0
        %2164 = vmatprep.subr.mxu0 0.0
        %2165 = vmatpush1.msra.mxu0 0.0
        %2166 = vmatprep.subr.mxu0 0.0
        %2167 = vmatpush1.msra.mxu0 0.0
        %2168 = vmatprep.subr.mxu0 0.0
        %2169 = vmatpush1.msra.mxu0 0.0
        %2170 = vmatprep.mubr.f32.mxu0 0.0
        %2171 = vmatmul.mubr.f32.gmra.mrb[0].mxu0 %v2088
        %v2172 = vpop.f32.mrb[0].mxu0
        %v2173 = vadd.f32 %v2105, %v2172
        %v2174 = vpop.f32.mrb[0].mxu0
        %2175 = vdwg.mxu0
        %v2176 = vmul.f32 %v2173, 0.5
        %v2177 = vmul.f32 %v2173, 0.70710677
        %v2178 = verf.f32.pop %v2177
        %v2179 = vadd.f32 %v2178, 1.0
        %v2180 = vmul.f32 %v2176, %v2179
        %v2181 = vadd.f32 %v2180, %v2088
        %v2182 = vld [vmem:[#allocation16] sm:$0xff]
        %v2183 = vld [vmem:[#allocation16 + $0x8] sm:$0xff]
        %v2184 = vld [vmem:[#allocation16 + $0x10] sm:$0xff]
        %v2185 = vld [vmem:[#allocation16 + $0x18] sm:$0xff]
        %v2186 = vld [vmem:[#allocation16 + $0x20] sm:$0xff]
        %v2187 = vld [vmem:[#allocation16 + $0x28] sm:$0xff]
        %v2188 = vld [vmem:[#allocation16 + $0x30] sm:$0xff]
        %v2189 = vld [vmem:[#allocation16 + $0x38] sm:$0xff]
        %v2190 = vld [vmem:[#allocation16 + $0x40] sm:$0xff]
        %v2191 = vld [vmem:[#allocation16 + $0x48] sm:$0xff]
        %v2192 = vld [vmem:[#allocation16 + $0x50] sm:$0xff]
        %v2193 = vld [vmem:[#allocation16 + $0x58] sm:$0xff]
        %v2194 = vld [vmem:[#allocation16 + $0x60] sm:$0xff]
        %v2195 = vld [vmem:[#allocation16 + $0x68] sm:$0xff]
        %v2196 = vld [vmem:[#allocation16 + $0x70] sm:$0xff]
        %v2197 = vld [vmem:[#allocation16 + $0x78] sm:$0xff]
        %v2198 = vld [vmem:[%s59] sm:$0x1]
        %2199 = vmatprep.subr.mxu0 0.0
        %2200 = vmatpush1.msra.mxu0 %v2182
        %2201 = vmatprep.subr.mxu0 0.0
        %2202 = vmatpush1.msra.mxu0 %v2183
        %2203 = vmatprep.subr.mxu0 0.0
        %2204 = vmatpush1.msra.mxu0 %v2184
        %2205 = vmatprep.subr.mxu0 0.0
        %2206 = vmatpush1.msra.mxu0 %v2185
        %2207 = vmatprep.subr.mxu0 0.0
        %2208 = vmatpush1.msra.mxu0 %v2186
        %2209 = vmatprep.subr.mxu0 0.0
        %2210 = vmatpush1.msra.mxu0 %v2187
        %2211 = vmatprep.subr.mxu0 0.0
        %2212 = vmatpush1.msra.mxu0 %v2188
        %2213 = vmatprep.subr.mxu0 0.0
        %2214 = vmatpush1.msra.mxu0 %v2189
        %2215 = vmatprep.subr.mxu0 0.0
        %2216 = vmatpush1.msra.mxu0 %v2190
        %2217 = vmatprep.subr.mxu0 0.0
        %2218 = vmatpush1.msra.mxu0 %v2191
        %2219 = vmatprep.subr.mxu0 0.0
        %2220 = vmatpush1.msra.mxu0 %v2192
        %2221 = vmatprep.subr.mxu0 0.0
        %2222 = vmatpush1.msra.mxu0 %v2193
        %2223 = vmatprep.subr.mxu0 0.0
        %2224 = vmatpush1.msra.mxu0 %v2194
        %2225 = vmatprep.subr.mxu0 0.0
        %2226 = vmatpush1.msra.mxu0 %v2195
        %2227 = vmatprep.subr.mxu0 0.0
        %2228 = vmatpush1.msra.mxu0 %v2196
        %2229 = vmatprep.subr.mxu0 0.0
        %2230 = vmatpush1.msra.mxu0 %v2197
        %2231 = vmatprep.subr.mxu0 0.0
        %2232 = vmatpush1.msra.mxu0 0.0
        %2233 = vmatprep.subr.mxu0 0.0
        %2234 = vmatpush1.msra.mxu0 0.0
        %2235 = vmatprep.subr.mxu0 0.0
        %2236 = vmatpush1.msra.mxu0 0.0
        %2237 = vmatprep.subr.mxu0 0.0
        %2238 = vmatpush1.msra.mxu0 0.0
        %2239 = vmatprep.subr.mxu0 0.0
        %2240 = vmatpush1.msra.mxu0 0.0
        %2241 = vmatprep.subr.mxu0 0.0
        %2242 = vmatpush1.msra.mxu0 0.0
        %2243 = vmatprep.subr.mxu0 0.0
        %2244 = vmatpush1.msra.mxu0 0.0
        %2245 = vmatprep.subr.mxu0 0.0
        %2246 = vmatpush1.msra.mxu0 0.0
        %2247 = vmatprep.subr.mxu0 0.0
        %2248 = vmatpush1.msra.mxu0 0.0
        %2249 = vmatprep.subr.mxu0 0.0
        %2250 = vmatpush1.msra.mxu0 0.0
        %2251 = vmatprep.subr.mxu0 0.0
        %2252 = vmatpush1.msra.mxu0 0.0
        %2253 = vmatprep.subr.mxu0 0.0
        %2254 = vmatpush1.msra.mxu0 0.0
        %2255 = vmatprep.subr.mxu0 0.0
        %2256 = vmatpush1.msra.mxu0 0.0
        %2257 = vmatprep.subr.mxu0 0.0
        %2258 = vmatpush1.msra.mxu0 0.0
        %2259 = vmatprep.subr.mxu0 0.0
        %2260 = vmatpush1.msra.mxu0 0.0
        %2261 = vmatprep.subr.mxu0 0.0
        %2262 = vmatpush1.msra.mxu0 0.0
        %2263 = vmatprep.mubr.f32.mxu0 0.0
        %2264 = vmatmul.mubr.f32.gmra.mrb[0].mxu0 %v2181
        %v2265 = vpop.f32.mrb[0].mxu0
        %v2266 = vadd.f32 %v2198, %v2265
        %v2267 = vpop.f32.mrb[0].mxu0
        %2268 = vdwg.mxu0
        %2269 = vst [vmem:[%s1062] sm:$0x1] %v2266
        %s2270 = sand.u32 %s728, 1
        %s2271 = scalar_lea.sflag [#allocation4], %s2270
        %s2272 = sand.u32 %s728, 1
        %s2273 = scalar_lea.vmem [#allocation17], %s2272
        // Predicated region
        $region177: #{roberta_wrapper_forward.1} parent=139 // pred_check
          %p2274 = pneg %p738
        $region178: #{roberta_wrapper_forward.1} parent=139 // pred_check_branch
          %2276 = sbr.rel (%p2274) target = $region180
        $region179: #{roberta_wrapper_forward.1} parent=139 // pred_region
          %s2278 = ssub.s32 16, 16
          %2279 = vsyncadd %s2271, %s2278
          %s2280 = smul.addr %s80, 16
          %s2281 = scalar_lea.hbm %s61, %s2280
          %s2283 = sshll.u32 %s2273, 4
          %s2284 = int_to_ptr.vmem [resolvable:$true] %s2283
          %2286 = dma.vmem_to_hbm [thread:$0]  %s2284, 16, %s2281, %s2271
        $region180: #{roberta_wrapper_forward.1} parent=139 // pred_fallthru
          _
      $region140: #{roberta_wrapper_forward.1} parent=5 // pred_fallthru
        _
      %p2287 = scmp.le.s32.totalorder 2, %s75
      // Predicated region
      $region181: #{roberta_wrapper_forward.1} parent=5 // pred_check
        %p2288 = pneg %p2287
      $region182: #{roberta_wrapper_forward.1} parent=5 // pred_check_branch
        %2290 = sbr.rel (%p2288) target = $region184
      $region183: #{roberta_wrapper_forward.1} parent=5 // pred_region
        %s2291 = ssub.s32 %s75, 2
        // Predicated region
        $region185: #{roberta_wrapper_forward.1} parent=183 // pred_check
          %p2292 = pneg %p744
        $region186: #{roberta_wrapper_forward.1} parent=183 // pred_check_branch
          %2294 = sbr.rel (%p2292) target = $region188
        $region187: #{roberta_wrapper_forward.1} parent=183 // pred_region
          %s2295 = sand.u32 %s729, 1
          %s2296 = scalar_lea.sflag [#allocation4], %s2295
          %s2297 = sand.u32 %s729, 1
          %s2298 = scalar_lea.vmem [#allocation17], %s2297
          %2299 = dma.done %s2296, 16
        $region188: #{roberta_wrapper_forward.1} parent=183 // pred_fallthru
          _
      $region184: #{roberta_wrapper_forward.1} parent=5 // pred_fallthru
        _
    $region6: #{roberta_wrapper_forward.1} parent=1 // loop_footer
      %s79 = sadd.s32 1, %s75
    $region7: #{roberta_wrapper_forward.1} parent=1 // loop_footer_branch
      %74 = sbr.rel target = $region3
    $region8: #{roberta_wrapper_forward.1} parent=1 // loop_exit
      _
    %2300 = vsyncpa [#allocation3], 1
    %s2301 = scalar_lea.sflag [#allocation3], 1
    %2302 = vsyncpa %s2301, 1
    %2303 = vsyncpa [#allocation6], 1
    %2304 = vsyncpa [#allocation9], 1
    %2305 = vsyncpa [#allocation12], 1
    %2306 = vsyncpa [#allocation15], 1
    %2307 = vsyncpa [#allocation4], 1
    %s2308 = scalar_lea.sflag [#allocation4], 1
    %2309 = vsyncpa %s2308, 1

</llo_original>
